<compile_context>
chip_gen: v7x
topology: tpu7x:2x2x1
jax: 0.10.0
libtpu: 0.0.40
codegen_flags: <defaults>
</compile_context>

<pallas_src>
import jax
import jax.numpy as jnp
from jax.experimental import pallas as pl
from jax.experimental.pallas import tpu as pltpu

PHYSICS_LS = 128
NIN = 38 + 38 + 1 + 19 + 1 + 38 + 1   # 136  (BM, FF, FT, IA, IP, IU, RB)
NOUT = 3                              # rt_head nout (rt.view(n, 3))
OUT_PAD = 8                           # padded output rows (3 real + 5 zero)
MAX_TB = 2048                         # max points per grid step (lanes)


def _swish(x, beta):
    # ActF: x * sigmoid(beta*x); sigmoid via tanh identity -> single EUP op.
    return x * (0.5 * (1.0 + jnp.tanh(0.5 * beta * x)))


# ---------------------------------------------------------------------------
# Fused kernel: InputNet (per tile) + PtsEncoder + aggregate + FHead
# ---------------------------------------------------------------------------
def liuqe_kernel(betas_ref,                       # SMEM (6,)  scalar prefetch
                 pts_ref,                         # VMEM (2, TB)   point axis on lanes
                 x_ref, ms_ref,                   # (1, NIN), (2, NIN)
                 w_i1_ref, b_i1_ref,              # (NIN, 128), (1, 128)
                 w_i2_ref, b_i2_ref,              # (128, 64),  (1, 64)
                 w_i3_ref, b_i3_ref,              # (64, 128),  (1, 128)
                 w_p1_ref, b_p1_ref,              # (16, 2),    (16, 1)
                 w_p2_ref, b_p2_ref,              # (128, 16),  (128, 1)
                 w_h1_ref, b_h1_ref,              # (64, 128),  (64, 1)
                 w_h2_ref, b_h2_ref,              # (8, 64),    (8, 1)   zero-padded
                 o_ref):                          # VMEM (8, TB)  lane-dense
    f32 = jnp.float32
    beta_i1, beta_i2 = betas_ref[0], betas_ref[1]
    beta_p1, beta_p2 = betas_ref[2], betas_ref[3]
    beta_h1, beta_h2 = betas_ref[4], betas_ref[5]

    # ---- InputNet (recomputed per tile; negligible vs. per-point work) ------
    xn = (x_ref[...] - ms_ref[0:1, :]) / ms_ref[1:2, :]                  # (1, NIN)
    h = jnp.dot(xn, w_i1_ref[...], preferred_element_type=f32) + b_i1_ref[...]
    h = _swish(h, beta_i1)                                               # (1, 128)
    h = jnp.dot(h, w_i2_ref[...], preferred_element_type=f32) + b_i2_ref[...]
    h = _swish(h, beta_i2)                                               # (1, 64)
    ph_row = jnp.tanh(
        jnp.dot(h, w_i3_ref[...], preferred_element_type=f32) + b_i3_ref[...])  # (1, 128)

    # ---- PtsEncoder, feature-major (point axis on lanes) --------------------
    pts = pts_ref[...]                                                   # (2, TB)
    # 2->16 layer as two VPU FMAs (K=2 too small to be worth an MXU pass).
    h1 = (w_p1_ref[:, 0:1] * pts[0:1, :]
          + w_p1_ref[:, 1:2] * pts[1:2, :] + b_p1_ref[...])              # (16, TB)
    h1 = _swish(h1, beta_p1)

    ps = jnp.dot(w_p2_ref[...], h1, preferred_element_type=f32) + b_p2_ref[...]
    ps = _swish(ps, beta_p2)                                             # (128, TB)

    # ---- aggregate_pts_ph folded into the FHead weight ----------------------
    #   (ps ∘ ph) @ w_h1  ==  (w_h1_T ∘ ph_row) @ ps_T
    w_h1_s = w_h1_ref[...] * ph_row                                      # (64, 128)
    h2 = jnp.dot(w_h1_s, ps, preferred_element_type=f32) + b_h1_ref[...]
    h2 = _swish(h2, beta_h1)                                             # (64, TB)

    out = jnp.dot(w_h2_ref[...], h2, preferred_element_type=f32) + b_h2_ref[...]
    o_ref[...] = _swish(out, beta_h2)                                    # (8, TB)


# ---------------------------------------------------------------------------
# Wrapper
# ---------------------------------------------------------------------------
def _round_up(a, m):
    return ((a + m - 1) // m) * m


def liuqe_rt_net(x, r, z, params, max_tile=MAX_TB):
    n = int(r.shape[0])
    n_eff = max(n, 1)

    # Tiles are multiples of 128 (lane-dense (.,TB) blocks).  Target >= 2 grid
    # steps when there is enough work so v7x megacore shards the point axis.
    half = _round_up((n_eff + 1) // 2, 128)
    tb = min(max_tile, half)
    n_pad = _round_up(n_eff, tb)
    num_tiles = n_pad // tb

    # Point axis last (on lanes).
    pts_t = jnp.stack([r, z], axis=0)                                    # (2, n)
    if n_pad != n:
        pts_t = jnp.pad(pts_t, ((0, 0), (0, n_pad - n)))

    # Transposed per-point weights; 64->3 head zero-padded to 64->8 rows.
    w_p1_t = params["w_p1"].T                                            # (16, 2)
    b_p1_c = params["b_p1"].T                                            # (16, 1)
    w_p2_t = params["w_p2"].T                                            # (128, 16)
    b_p2_c = params["b_p2"].T                                            # (128, 1)
    w_h1_t = params["w_h1"].T                                            # (64, 128)
    b_h1_c = params["b_h1"].T                                            # (64, 1)
    w_h2_t = jnp.pad(params["w_h2"].T, ((0, OUT_PAD - NOUT), (0, 0)))    # (8, 64)
    b_h2_c = jnp.pad(params["b_h2"].T, ((0, OUT_PAD - NOUT), (0, 0)))    # (8, 1)

    x_row = x.reshape(1, NIN)

    # Advisory cost hint.
    flops_pt = 2 * (2 * 16 + 16 * PHYSICS_LS + PHYSICS_LS * 64 + 64 * OUT_PAD)
    flops_tile = 2 * (NIN * 128 + 128 * 64 + 64 * PHYSICS_LS) + 64 * PHYSICS_LS
    trans_pt = 16 + PHYSICS_LS + 64 + OUT_PAD
    trans_tile = 128 + 64 + PHYSICS_LS
    weight_bytes = 4 * (3 * NIN + NIN * 128 + 128 + 128 * 64 + 64 + 64 * 128 + 128
                        + 16 * 2 + 16 + 128 * 16 + 128 + 64 * 128 + 64
                        + OUT_PAD * 64 + OUT_PAD)
    cost = pl.CostEstimate(
        flops=n_pad * flops_pt + num_tiles * flops_tile,
        transcendentals=n_pad * trans_pt + num_tiles * trans_tile,
        bytes_accessed=n_pad * 4 * (2 + OUT_PAD) + weight_bytes,
    )

    const = lambda i, betas: (0, 0)   # resident blocks (weights, x, ph inputs)

    grid_spec = pltpu.PrefetchScalarGridSpec(
        num_scalar_prefetch=1,                       # betas -> SMEM
        grid=(num_tiles,),
        in_specs=[
            pl.BlockSpec((2, tb), lambda i, betas: (0, i)),              # pts_T
            pl.BlockSpec((1, NIN), const),                               # x
            pl.BlockSpec((2, NIN), const),                               # mean/std
            pl.BlockSpec((NIN, 128), const),                             # w_i1
            pl.BlockSpec((1, 128), const),                               # b_i1
            pl.BlockSpec((128, 64), const),                              # w_i2
            pl.BlockSpec((1, 64), const),                                # b_i2
            pl.BlockSpec((64, PHYSICS_LS), const),                       # w_i3
            pl.BlockSpec((1, PHYSICS_LS), const),                        # b_i3
            pl.BlockSpec((16, 2), const),                                # w_p1_T
            pl.BlockSpec((16, 1), const),                                # b_p1
            pl.BlockSpec((PHYSICS_LS, 16), const),                       # w_p2_T
            pl.BlockSpec((PHYSICS_LS, 1), const),                        # b_p2
            pl.BlockSpec((64, PHYSICS_LS), const),                       # w_h1_T
            pl.BlockSpec((64, 1), const),                                # b_h1
            pl.BlockSpec((OUT_PAD, 64), const),                          # w_h2_T (padded)
            pl.BlockSpec((OUT_PAD, 1), const),                           # b_h2 (padded)
        ],
        out_specs=pl.BlockSpec((OUT_PAD, tb), lambda i, betas: (0, i)),
    )

    out_t = pl.pallas_call(
        liuqe_kernel,
        out_shape=jax.ShapeDtypeStruct((OUT_PAD, n_pad), jnp.float32),
        grid_spec=grid_spec,
        compiler_params=pltpu.CompilerParams(dimension_semantics=("parallel",)),
        cost_estimate=cost,
    )(
        params["betas"], pts_t, x_row, params["x_mean_std"],
        params["w_i1"], params["b_i1"],
        params["w_i2"], params["b_i2"],
        params["w_i3"], params["b_i3"],
        w_p1_t, b_p1_c, w_p2_t, b_p2_c,
        w_h1_t, b_h1_c, w_h2_t, b_h2_c,
    )

    return out_t[:NOUT, :n].T                                            # (n, 3)


# ---------------------------------------------------------------------------
# Params (PyTorch-Linear-style init) and pure-JAX reference
# ---------------------------------------------------------------------------
def init_params(key):
    ks = jax.random.split(key, 16)

    def lin(kw, kb, fan_in, fan_out):
        bound = float(fan_in) ** -0.5
        w = jax.random.uniform(kw, (fan_in, fan_out), jnp.float32, -bound, bound)
        b = jax.random.uniform(kb, (1, fan_out), jnp.float32, -bound, bound)
        return w, b

    w_i1, b_i1 = lin(ks[0], ks[1], NIN, 128)
    w_i2, b_i2 = lin(ks[2], ks[3], 128, 64)
    w_i3, b_i3 = lin(ks[4], ks[5], 64, PHYSICS_LS)
    w_p1, b_p1 = lin(ks[6], ks[7], 2, 16)
    w_p2, b_p2 = lin(ks[8], ks[9], 16, PHYSICS_LS)
    w_h1, b_h1 = lin(ks[10], ks[11], PHYSICS_LS, 64)
    w_h2, b_h2 = lin(ks[12], ks[13], 64, NOUT)
    mean = jax.random.uniform(ks[14], (NIN,), jnp.float32, -0.5, 0.5)
    std = jax.random.uniform(ks[15], (NIN,), jnp.float32, 0.5, 1.5)
    x_mean_std = jnp.stack([mean, std], axis=0)               # (2, NIN)
    # ActF betas: [input_net x2, pts_enc x2, rt_head x2] (PyTorch inits to 1.0;
    # varied here to exercise the beta plumbing — learned params anyway).
    betas = jnp.array([1.0, 0.9, 1.1, 1.05, 0.95, 1.2], jnp.float32)
    return dict(w_i1=w_i1, b_i1=b_i1, w_i2=w_i2, b_i2=b_i2, w_i3=w_i3, b_i3=b_i3,
                w_p1=w_p1, b_p1=b_p1, w_p2=w_p2, b_p2=b_p2,
                w_h1=w_h1, b_h1=b_h1, w_h2=w_h2, b_h2=b_h2,
                x_mean_std=x_mean_std, betas=betas)


def reference(x, r, z, p):
    def sw(v, beta):
        return v * (1.0 / (1.0 + jnp.exp(-beta * v)))
    ms = p["x_mean_std"]
    xn = ((x - ms[0]) / ms[1])[None, :]                                   # (1, NIN)
    h = sw(xn @ p["w_i1"] + p["b_i1"], p["betas"][0])
    h = sw(h @ p["w_i2"] + p["b_i2"], p["betas"][1])
    ph = jnp.tanh(h @ p["w_i3"] + p["b_i3"])                              # (1, 128)
    s = (r[:, None] * p["w_p1"][0:1, :]
         + z[:, None] * p["w_p1"][1:2, :] + p["b_p1"])                    # (n, 16)
    s = sw(s, p["betas"][2])
    ps = sw(s @ p["w_p2"] + p["b_p2"], p["betas"][3])                     # (n, 128)
    psh = ps * ph                                                         # aggregate
    h = sw(psh @ p["w_h1"] + p["b_h1"], p["betas"][4])                    # (n, 64)
    rt = sw(h @ p["w_h2"] + p["b_h2"], p["betas"][5])                     # (n, 3)
    return rt


if __name__ == "__main__":
    key = jax.random.PRNGKey(0)
    kp, kx, kr, kz = jax.random.split(key, 4)
    params = init_params(kp)

    n = 16
    x = jax.random.normal(kx, (NIN,), jnp.float32)
    r = jax.random.uniform(kr, (n,), jnp.float32, 0.6, 1.2)
    z = jax.random.uniform(kz, (n,), jnp.float32, -0.75, 0.75)

    out = liuqe_rt_net(x, r, z, params)
    out = jax.block_until_ready(out)

    ref = reference(x, r, z, params)
    assert out.shape == (n, NOUT), out.shape
    max_err = float(jnp.max(jnp.abs(out - ref)))
    assert jnp.allclose(out, ref, atol=1e-4, rtol=1e-3), max_err

    print("KERNEL_OK")
</pallas_src>

<mosaic_0001>
module attributes {stable_mosaic.version = 11 : i64} {
  func.func @liuqe_kernel(%arg0: i32, %arg1: memref<6xf32, #tpu.memory_space<smem>>, %arg2: memref<2x128xf32, #tpu.memory_space<vmem>>, %arg3: memref<1x136xf32, #tpu.memory_space<vmem>>, %arg4: memref<2x136xf32, #tpu.memory_space<vmem>>, %arg5: memref<136x128xf32, #tpu.memory_space<vmem>>, %arg6: memref<1x128xf32, #tpu.memory_space<vmem>>, %arg7: memref<128x64xf32, #tpu.memory_space<vmem>>, %arg8: memref<1x64xf32, #tpu.memory_space<vmem>>, %arg9: memref<64x128xf32, #tpu.memory_space<vmem>>, %arg10: memref<1x128xf32, #tpu.memory_space<vmem>>, %arg11: memref<16x2xf32, #tpu.memory_space<vmem>>, %arg12: memref<16x1xf32, #tpu.memory_space<vmem>>, %arg13: memref<128x16xf32, #tpu.memory_space<vmem>>, %arg14: memref<128x1xf32, #tpu.memory_space<vmem>>, %arg15: memref<64x128xf32, #tpu.memory_space<vmem>>, %arg16: memref<64x1xf32, #tpu.memory_space<vmem>>, %arg17: memref<8x64xf32, #tpu.memory_space<vmem>>, %arg18: memref<8x1xf32, #tpu.memory_space<vmem>>, %arg19: memref<8x128xf32, #tpu.memory_space<vmem>>) attributes {dimension_semantics = [#tpu.dimension_semantics<parallel>], iteration_bounds = array<i64: 1>, scalar_prefetch = 1 : i64, scratch_operands = 0 : i64, tpu.core_type = #tpu.core_type<tc>, window_params = [{transform_indices = @transform_0, window_bounds = array<i64: 2, 128>}, {pipeline_mode = #tpu.pipeline_mode<synchronous>, transform_indices = @transform_1, window_bounds = array<i64: 1, 136>}, {pipeline_mode = #tpu.pipeline_mode<synchronous>, transform_indices = @transform_2, window_bounds = array<i64: 2, 136>}, {pipeline_mode = #tpu.pipeline_mode<synchronous>, transform_indices = @transform_3, window_bounds = array<i64: 136, 128>}, {pipeline_mode = #tpu.pipeline_mode<synchronous>, transform_indices = @transform_4, window_bounds = array<i64: 1, 128>}, {pipeline_mode = #tpu.pipeline_mode<synchronous>, transform_indices = @transform_5, window_bounds = array<i64: 128, 64>}, {pipeline_mode = #tpu.pipeline_mode<synchronous>, transform_indices = @transform_6, window_bounds = array<i64: 1, 64>}, {pipeline_mode = #tpu.pipeline_mode<synchronous>, transform_indices = @transform_7, window_bounds = array<i64: 64, 128>}, {pipeline_mode = #tpu.pipeline_mode<synchronous>, transform_indices = @transform_8, window_bounds = array<i64: 1, 128>}, {pipeline_mode = #tpu.pipeline_mode<synchronous>, transform_indices = @transform_9, window_bounds = array<i64: 16, 2>}, {pipeline_mode = #tpu.pipeline_mode<synchronous>, transform_indices = @transform_10, window_bounds = array<i64: 16, 1>}, {pipeline_mode = #tpu.pipeline_mode<synchronous>, transform_indices = @transform_11, window_bounds = array<i64: 128, 16>}, {pipeline_mode = #tpu.pipeline_mode<synchronous>, transform_indices = @transform_12, window_bounds = array<i64: 128, 1>}, {pipeline_mode = #tpu.pipeline_mode<synchronous>, transform_indices = @transform_13, window_bounds = array<i64: 64, 128>}, {pipeline_mode = #tpu.pipeline_mode<synchronous>, transform_indices = @transform_14, window_bounds = array<i64: 64, 1>}, {pipeline_mode = #tpu.pipeline_mode<synchronous>, transform_indices = @transform_15, window_bounds = array<i64: 8, 64>}, {pipeline_mode = #tpu.pipeline_mode<synchronous>, transform_indices = @transform_16, window_bounds = array<i64: 8, 1>}, {transform_indices = @transform_17, window_bounds = array<i64: 8, 128>}]} {
    %c0 = arith.constant 0 : index
    %0 = memref.load %arg1[%c0] : memref<6xf32, #tpu.memory_space<smem>>
    %c1 = arith.constant 1 : index
    %1 = memref.load %arg1[%c1] : memref<6xf32, #tpu.memory_space<smem>>
    %c2 = arith.constant 2 : index
    %2 = memref.load %arg1[%c2] : memref<6xf32, #tpu.memory_space<smem>>
    %c3 = arith.constant 3 : index
    %3 = memref.load %arg1[%c3] : memref<6xf32, #tpu.memory_space<smem>>
    %c4 = arith.constant 4 : index
    %4 = memref.load %arg1[%c4] : memref<6xf32, #tpu.memory_space<smem>>
    %c5 = arith.constant 5 : index
    %5 = memref.load %arg1[%c5] : memref<6xf32, #tpu.memory_space<smem>>
    %c0_0 = arith.constant 0 : index
    %c0_1 = arith.constant 0 : index
    %6 = vector.load %arg3[%c0_0, %c0_1] : memref<1x136xf32, #tpu.memory_space<vmem>>, vector<1x136xf32>
    %c0_2 = arith.constant 0 : index
    %c0_3 = arith.constant 0 : index
    %7 = vector.load %arg4[%c0_2, %c0_3] : memref<2x136xf32, #tpu.memory_space<vmem>>, vector<1x136xf32>
    %8 = arith.subf %6, %7 : vector<1x136xf32>
    %c1_4 = arith.constant 1 : index
    %c0_5 = arith.constant 0 : index
    %9 = vector.load %arg4[%c1_4, %c0_5] : memref<2x136xf32, #tpu.memory_space<vmem>>, vector<1x136xf32>
    %10 = arith.divf %8, %9 : vector<1x136xf32>
    %c0_6 = arith.constant 0 : index
    %c0_7 = arith.constant 0 : index
    %11 = vector.load %arg5[%c0_6, %c0_7] : memref<136x128xf32, #tpu.memory_space<vmem>>, vector<136x128xf32>
    %cst = arith.constant dense<0.000000e+00> : vector<1x128xf32>
    %12 = tpu.matmul %10, %11, %cst {dimension_numbers = #tpu.dot_dimension_numbers<[1], [0], [0], [1], [0, 0, 1, 1], [], []>} : vector<1x136xf32>, vector<136x128xf32>, vector<1x128xf32> -> vector<1x128xf32>
    %c0_8 = arith.constant 0 : index
    %c0_9 = arith.constant 0 : index
    %13 = vector.load %arg6[%c0_8, %c0_9] : memref<1x128xf32, #tpu.memory_space<vmem>>, vector<1x128xf32>
    %14 = arith.addf %12, %13 : vector<1x128xf32>
    %cst_10 = arith.constant 5.000000e-01 : f32
    %15 = arith.mulf %cst_10, %0 : f32
    %16 = vector.broadcast %15 : f32 to vector<1x128xf32>
    %17 = arith.mulf %16, %14 : vector<1x128xf32>
    %18 = math.tanh %17 : vector<1x128xf32>
    %cst_11 = arith.constant 1.000000e+00 : f32
    %19 = vector.broadcast %cst_11 : f32 to vector<1x128xf32>
    %20 = arith.addf %19, %18 : vector<1x128xf32>
    %cst_12 = arith.constant 5.000000e-01 : f32
    %21 = vector.broadcast %cst_12 : f32 to vector<1x128xf32>
    %22 = arith.mulf %21, %20 : vector<1x128xf32>
    %23 = arith.mulf %14, %22 : vector<1x128xf32>
    %c0_13 = arith.constant 0 : index
    %c0_14 = arith.constant 0 : index
    %24 = vector.load %arg7[%c0_13, %c0_14] : memref<128x64xf32, #tpu.memory_space<vmem>>, vector<128x64xf32>
    %cst_15 = arith.constant dense<0.000000e+00> : vector<1x64xf32>
    %25 = tpu.matmul %23, %24, %cst_15 {dimension_numbers = #tpu.dot_dimension_numbers<[1], [0], [0], [1], [0, 0, 1, 1], [], []>} : vector<1x128xf32>, vector<128x64xf32>, vector<1x64xf32> -> vector<1x64xf32>
    %c0_16 = arith.constant 0 : index
    %c0_17 = arith.constant 0 : index
    %26 = vector.load %arg8[%c0_16, %c0_17] : memref<1x64xf32, #tpu.memory_space<vmem>>, vector<1x64xf32>
    %27 = arith.addf %25, %26 : vector<1x64xf32>
    %cst_18 = arith.constant 5.000000e-01 : f32
    %28 = arith.mulf %cst_18, %1 : f32
    %29 = vector.broadcast %28 : f32 to vector<1x64xf32>
    %30 = arith.mulf %29, %27 : vector<1x64xf32>
    %31 = math.tanh %30 : vector<1x64xf32>
    %cst_19 = arith.constant 1.000000e+00 : f32
    %32 = vector.broadcast %cst_19 : f32 to vector<1x64xf32>
    %33 = arith.addf %32, %31 : vector<1x64xf32>
    %cst_20 = arith.constant 5.000000e-01 : f32
    %34 = vector.broadcast %cst_20 : f32 to vector<1x64xf32>
    %35 = arith.mulf %34, %33 : vector<1x64xf32>
    %36 = arith.mulf %27, %35 : vector<1x64xf32>
    %c0_21 = arith.constant 0 : index
    %c0_22 = arith.constant 0 : index
    %37 = vector.load %arg9[%c0_21, %c0_22] : memref<64x128xf32, #tpu.memory_space<vmem>>, vector<64x128xf32>
    %cst_23 = arith.constant dense<0.000000e+00> : vector<1x128xf32>
    %38 = tpu.matmul %36, %37, %cst_23 {dimension_numbers = #tpu.dot_dimension_numbers<[1], [0], [0], [1], [0, 0, 1, 1], [], []>} : vector<1x64xf32>, vector<64x128xf32>, vector<1x128xf32> -> vector<1x128xf32>
    %c0_24 = arith.constant 0 : index
    %c0_25 = arith.constant 0 : index
    %39 = vector.load %arg10[%c0_24, %c0_25] : memref<1x128xf32, #tpu.memory_space<vmem>>, vector<1x128xf32>
    %40 = arith.addf %38, %39 : vector<1x128xf32>
    %41 = math.tanh %40 : vector<1x128xf32>
    %c0_26 = arith.constant 0 : index
    %c0_27 = arith.constant 0 : index
    %42 = vector.load %arg2[%c0_26, %c0_27] : memref<2x128xf32, #tpu.memory_space<vmem>>, vector<2x128xf32>
    %c0_28 = arith.constant 0 : index
    %c0_29 = arith.constant 0 : index
    %43 = vector.load %arg11[%c0_28, %c0_29] : memref<16x2xf32, #tpu.memory_space<vmem>>, vector<16x1xf32>
    %44 = vector.extract_strided_slice %42 {offsets = [0, 0], sizes = [1, 128], strides = [1, 1]} : vector<2x128xf32> to vector<1x128xf32>
    %45 = vector.broadcast %43 : vector<16x1xf32> to vector<16x128xf32>
    %46 = vector.broadcast %44 : vector<1x128xf32> to vector<16x128xf32>
    %47 = arith.mulf %45, %46 : vector<16x128xf32>
    %c0_30 = arith.constant 0 : index
    %c1_31 = arith.constant 1 : index
    %48 = vector.load %arg11[%c0_30, %c1_31] : memref<16x2xf32, #tpu.memory_space<vmem>>, vector<16x1xf32>
    %49 = vector.extract_strided_slice %42 {offsets = [1, 0], sizes = [1, 128], strides = [1, 1]} : vector<2x128xf32> to vector<1x128xf32>
    %50 = vector.broadcast %48 : vector<16x1xf32> to vector<16x128xf32>
    %51 = vector.broadcast %49 : vector<1x128xf32> to vector<16x128xf32>
    %52 = arith.mulf %50, %51 : vector<16x128xf32>
    %53 = arith.addf %47, %52 : vector<16x128xf32>
    %c0_32 = arith.constant 0 : index
    %c0_33 = arith.constant 0 : index
    %54 = vector.load %arg12[%c0_32, %c0_33] : memref<16x1xf32, #tpu.memory_space<vmem>>, vector<16x1xf32>
    %55 = vector.broadcast %54 : vector<16x1xf32> to vector<16x128xf32>
    %56 = arith.addf %53, %55 : vector<16x128xf32>
    %cst_34 = arith.constant 5.000000e-01 : f32
    %57 = arith.mulf %cst_34, %2 : f32
    %58 = vector.broadcast %57 : f32 to vector<16x128xf32>
    %59 = arith.mulf %58, %56 : vector<16x128xf32>
    %60 = math.tanh %59 : vector<16x128xf32>
    %cst_35 = arith.constant 1.000000e+00 : f32
    %61 = vector.broadcast %cst_35 : f32 to vector<16x128xf32>
    %62 = arith.addf %61, %60 : vector<16x128xf32>
    %cst_36 = arith.constant 5.000000e-01 : f32
    %63 = vector.broadcast %cst_36 : f32 to vector<16x128xf32>
    %64 = arith.mulf %63, %62 : vector<16x128xf32>
    %65 = arith.mulf %56, %64 : vector<16x128xf32>
    %c0_37 = arith.constant 0 : index
    %c0_38 = arith.constant 0 : index
    %66 = vector.load %arg13[%c0_37, %c0_38] : memref<128x16xf32, #tpu.memory_space<vmem>>, vector<128x16xf32>
    %cst_39 = arith.constant dense<0.000000e+00> : vector<128x128xf32>
    %67 = tpu.matmul %66, %65, %cst_39 {dimension_numbers = #tpu.dot_dimension_numbers<[1], [0], [0], [1], [0, 0, 1, 1], [], []>} : vector<128x16xf32>, vector<16x128xf32>, vector<128x128xf32> -> vector<128x128xf32>
    %c0_40 = arith.constant 0 : index
    %c0_41 = arith.constant 0 : index
    %68 = vector.load %arg14[%c0_40, %c0_41] : memref<128x1xf32, #tpu.memory_space<vmem>>, vector<128x1xf32>
    %69 = vector.broadcast %68 : vector<128x1xf32> to vector<128x128xf32>
    %70 = arith.addf %67, %69 : vector<128x128xf32>
    %cst_42 = arith.constant 5.000000e-01 : f32
    %71 = arith.mulf %cst_42, %3 : f32
    %72 = vector.broadcast %71 : f32 to vector<128x128xf32>
    %73 = arith.mulf %72, %70 : vector<128x128xf32>
    %74 = math.tanh %73 : vector<128x128xf32>
    %cst_43 = arith.constant 1.000000e+00 : f32
    %75 = vector.broadcast %cst_43 : f32 to vector<128x128xf32>
    %76 = arith.addf %75, %74 : vector<128x128xf32>
    %cst_44 = arith.constant 5.000000e-01 : f32
    %77 = vector.broadcast %cst_44 : f32 to vector<128x128xf32>
    %78 = arith.mulf %77, %76 : vector<128x128xf32>
    %79 = arith.mulf %70, %78 : vector<128x128xf32>
    %c0_45 = arith.constant 0 : index
    %c0_46 = arith.constant 0 : index
    %80 = vector.load %arg15[%c0_45, %c0_46] : memref<64x128xf32, #tpu.memory_space<vmem>>, vector<64x128xf32>
    %81 = vector.broadcast %41 : vector<1x128xf32> to vector<64x128xf32>
    %82 = arith.mulf %80, %81 : vector<64x128xf32>
    %cst_47 = arith.constant dense<0.000000e+00> : vector<64x128xf32>
    %83 = tpu.matmul %82, %79, %cst_47 {dimension_numbers = #tpu.dot_dimension_numbers<[1], [0], [0], [1], [0, 0, 1, 1], [], []>} : vector<64x128xf32>, vector<128x128xf32>, vector<64x128xf32> -> vector<64x128xf32>
    %c0_48 = arith.constant 0 : index
    %c0_49 = arith.constant 0 : index
    %84 = vector.load %arg16[%c0_48, %c0_49] : memref<64x1xf32, #tpu.memory_space<vmem>>, vector<64x1xf32>
    %85 = vector.broadcast %84 : vector<64x1xf32> to vector<64x128xf32>
    %86 = arith.addf %83, %85 : vector<64x128xf32>
    %cst_50 = arith.constant 5.000000e-01 : f32
    %87 = arith.mulf %cst_50, %4 : f32
    %88 = vector.broadcast %87 : f32 to vector<64x128xf32>
    %89 = arith.mulf %88, %86 : vector<64x128xf32>
    %90 = math.tanh %89 : vector<64x128xf32>
    %cst_51 = arith.constant 1.000000e+00 : f32
    %91 = vector.broadcast %cst_51 : f32 to vector<64x128xf32>
    %92 = arith.addf %91, %90 : vector<64x128xf32>
    %cst_52 = arith.constant 5.000000e-01 : f32
    %93 = vector.broadcast %cst_52 : f32 to vector<64x128xf32>
    %94 = arith.mulf %93, %92 : vector<64x128xf32>
    %95 = arith.mulf %86, %94 : vector<64x128xf32>
    %c0_53 = arith.constant 0 : index
    %c0_54 = arith.constant 0 : index
    %96 = vector.load %arg17[%c0_53, %c0_54] : memref<8x64xf32, #tpu.memory_space<vmem>>, vector<8x64xf32>
    %cst_55 = arith.constant dense<0.000000e+00> : vector<8x128xf32>
    %97 = tpu.matmul %96, %95, %cst_55 {dimension_numbers = #tpu.dot_dimension_numbers<[1], [0], [0], [1], [0, 0, 1, 1], [], []>} : vector<8x64xf32>, vector<64x128xf32>, vector<8x128xf32> -> vector<8x128xf32>
    %c0_56 = arith.constant 0 : index
    %c0_57 = arith.constant 0 : index
    %98 = vector.load %arg18[%c0_56, %c0_57] : memref<8x1xf32, #tpu.memory_space<vmem>>, vector<8x1xf32>
    %99 = vector.broadcast %98 : vector<8x1xf32> to vector<8x128xf32>
    %100 = arith.addf %97, %99 : vector<8x128xf32>
    %cst_58 = arith.constant 5.000000e-01 : f32
    %101 = arith.mulf %cst_58, %5 : f32
    %102 = vector.broadcast %101 : f32 to vector<8x128xf32>
    %103 = arith.mulf %102, %100 : vector<8x128xf32>
    %104 = math.tanh %103 : vector<8x128xf32>
    %cst_59 = arith.constant 1.000000e+00 : f32
    %105 = vector.broadcast %cst_59 : f32 to vector<8x128xf32>
    %106 = arith.addf %105, %104 : vector<8x128xf32>
    %cst_60 = arith.constant 5.000000e-01 : f32
    %107 = vector.broadcast %cst_60 : f32 to vector<8x128xf32>
    %108 = arith.mulf %107, %106 : vector<8x128xf32>
    %109 = arith.mulf %100, %108 : vector<8x128xf32>
    %c0_61 = arith.constant 0 : index
    %c0_62 = arith.constant 0 : index
    %110 = vector.load %arg19[%c0_61, %c0_62] : memref<8x128xf32, #tpu.memory_space<vmem>>, vector<8x128xf32>
    tpu.vector_store %arg19[%c0_61, %c0_62], %109 {strides = array<i32>} : memref<8x128xf32, #tpu.memory_space<vmem>>, vector<8x128xf32>,
    return
  }
  func.func @transform_0(%arg0: i32, %arg1: memref<6xf32, #tpu.memory_space<smem>>) -> (i32, i32) {
    %c0_i32 = arith.constant 0 : i32
    %c0_i32_0 = arith.constant 0 : i32
    return %c0_i32, %arg0 : i32, i32
  }
  func.func @transform_1(%arg0: i32, %arg1: memref<6xf32, #tpu.memory_space<smem>>) -> (i32, i32) {
    %c0_i32 = arith.constant 0 : i32
    %c0_i32_0 = arith.constant 0 : i32
    %c0_i32_1 = arith.constant 0 : i32
    return %c0_i32, %c0_i32_0 : i32, i32
  }
  func.func @transform_2(%arg0: i32, %arg1: memref<6xf32, #tpu.memory_space<smem>>) -> (i32, i32) {
    %c0_i32 = arith.constant 0 : i32
    %c0_i32_0 = arith.constant 0 : i32
    %c0_i32_1 = arith.constant 0 : i32
    return %c0_i32, %c0_i32_0 : i32, i32
  }
  func.func @transform_3(%arg0: i32, %arg1: memref<6xf32, #tpu.memory_space<smem>>) -> (i32, i32) {
    %c0_i32 = arith.constant 0 : i32
    %c0_i32_0 = arith.constant 0 : i32
    %c0_i32_1 = arith.constant 0 : i32
    return %c0_i32, %c0_i32_0 : i32, i32
  }
  func.func @transform_4(%arg0: i32, %arg1: memref<6xf32, #tpu.memory_space<smem>>) -> (i32, i32) {
    %c0_i32 = arith.constant 0 : i32
    %c0_i32_0 = arith.constant 0 : i32
    %c0_i32_1 = arith.constant 0 : i32
    return %c0_i32, %c0_i32_0 : i32, i32
  }
  func.func @transform_5(%arg0: i32, %arg1: memref<6xf32, #tpu.memory_space<smem>>) -> (i32, i32) {
    %c0_i32 = arith.constant 0 : i32
    %c0_i32_0 = arith.constant 0 : i32
    %c0_i32_1 = arith.constant 0 : i32
    return %c0_i32, %c0_i32_0 : i32, i32
  }
  func.func @transform_6(%arg0: i32, %arg1: memref<6xf32, #tpu.memory_space<smem>>) -> (i32, i32) {
    %c0_i32 = arith.constant 0 : i32
    %c0_i32_0 = arith.constant 0 : i32
    %c0_i32_1 = arith.constant 0 : i32
    return %c0_i32, %c0_i32_0 : i32, i32
  }
  func.func @transform_7(%arg0: i32, %arg1: memref<6xf32, #tpu.memory_space<smem>>) -> (i32, i32) {
    %c0_i32 = arith.constant 0 : i32
    %c0_i32_0 = arith.constant 0 : i32
    %c0_i32_1 = arith.constant 0 : i32
    return %c0_i32, %c0_i32_0 : i32, i32
  }
  func.func @transform_8(%arg0: i32, %arg1: memref<6xf32, #tpu.memory_space<smem>>) -> (i32, i32) {
    %c0_i32 = arith.constant 0 : i32
    %c0_i32_0 = arith.constant 0 : i32
    %c0_i32_1 = arith.constant 0 : i32
    return %c0_i32, %c0_i32_0 : i32, i32
  }
  func.func @transform_9(%arg0: i32, %arg1: memref<6xf32, #tpu.memory_space<smem>>) -> (i32, i32) {
    %c0_i32 = arith.constant 0 : i32
    %c0_i32_0 = arith.constant 0 : i32
    %c0_i32_1 = arith.constant 0 : i32
    return %c0_i32, %c0_i32_0 : i32, i32
  }
  func.func @transform_10(%arg0: i32, %arg1: memref<6xf32, #tpu.memory_space<smem>>) -> (i32, i32) {
    %c0_i32 = arith.constant 0 : i32
    %c0_i32_0 = arith.constant 0 : i32
    %c0_i32_1 = arith.constant 0 : i32
    return %c0_i32, %c0_i32_0 : i32, i32
  }
  func.func @transform_11(%arg0: i32, %arg1: memref<6xf32, #tpu.memory_space<smem>>) -> (i32, i32) {
    %c0_i32 = arith.constant 0 : i32
    %c0_i32_0 = arith.constant 0 : i32
    %c0_i32_1 = arith.constant 0 : i32
    return %c0_i32, %c0_i32_0 : i32, i32
  }
  func.func @transform_12(%arg0: i32, %arg1: memref<6xf32, #tpu.memory_space<smem>>) -> (i32, i32) {
    %c0_i32 = arith.constant 0 : i32
    %c0_i32_0 = arith.constant 0 : i32
    %c0_i32_1 = arith.constant 0 : i32
    return %c0_i32, %c0_i32_0 : i32, i32
  }
  func.func @transform_13(%arg0: i32, %arg1: memref<6xf32, #tpu.memory_space<smem>>) -> (i32, i32) {
    %c0_i32 = arith.constant 0 : i32
    %c0_i32_0 = arith.constant 0 : i32
    %c0_i32_1 = arith.constant 0 : i32
    return %c0_i32, %c0_i32_0 : i32, i32
  }
  func.func @transform_14(%arg0: i32, %arg1: memref<6xf32, #tpu.memory_space<smem>>) -> (i32, i32) {
    %c0_i32 = arith.constant 0 : i32
    %c0_i32_0 = arith.constant 0 : i32
    %c0_i32_1 = arith.constant 0 : i32
    return %c0_i32, %c0_i32_0 : i32, i32
  }
  func.func @transform_15(%arg0: i32, %arg1: memref<6xf32, #tpu.memory_space<smem>>) -> (i32, i32) {
    %c0_i32 = arith.constant 0 : i32
    %c0_i32_0 = arith.constant 0 : i32
    %c0_i32_1 = arith.constant 0 : i32
    return %c0_i32, %c0_i32_0 : i32, i32
  }
  func.func @transform_16(%arg0: i32, %arg1: memref<6xf32, #tpu.memory_space<smem>>) -> (i32, i32) {
    %c0_i32 = arith.constant 0 : i32
    %c0_i32_0 = arith.constant 0 : i32
    %c0_i32_1 = arith.constant 0 : i32
    return %c0_i32, %c0_i32_0 : i32, i32
  }
  func.func @transform_17(%arg0: i32, %arg1: memref<6xf32, #tpu.memory_space<smem>>) -> (i32, i32) {
    %c0_i32 = arith.constant 0 : i32
    %c0_i32_0 = arith.constant 0 : i32
    return %c0_i32, %arg0 : i32, i32
  }
}

</mosaic_0001>

<llo_original>
// kernel: tpu_custom_call.1
$region0: #{tpu_custom_call.1}
  #allocation0 [shape = 'u32[]', space=smem, size = 0x4, offset = 0x4, fixed_abs, tag = 'smem constant byte address 0x4 - core index']
  #allocation1 [shape = 'u32[144,128]{1,0:T(1,128)}', space=vmem, size = 0x12000, scoped, tag = 'internal scratch']
  #allocation2 [shape = 's32[1]{0}', space=sflag, size = 0x4, scoped, tag = 'scoped memory for tpu_custom_call.1']
  #allocation3 [shape = 'u8[512]{0}', space=smem, size = 0x200, scoped, tag = 'prefetched SMEM operand 0']
  %s0 = inlined_call_operand.vmem [shape: f32[6], index: 0, kind: input, shape index: {}]
  %s1 = inlined_call_operand.vmem [shape: f32[2,128], index: 1, kind: input, shape index: {}]
  %s2 = inlined_call_operand.vmem [shape: f32[1,136], index: 2, kind: input, shape index: {}]
  %s3 = inlined_call_operand.vmem [shape: f32[2,136], index: 3, kind: input, shape index: {}]
  %s4 = inlined_call_operand.vmem [shape: f32[136,128], index: 4, kind: input, shape index: {}]
  %s5 = inlined_call_operand.vmem [shape: f32[1,128], index: 5, kind: input, shape index: {}]
  %s6 = inlined_call_operand.vmem [shape: f32[128,64], index: 6, kind: input, shape index: {}]
  %s7 = inlined_call_operand.vmem [shape: f32[1,64], index: 7, kind: input, shape index: {}]
  %s8 = inlined_call_operand.vmem [shape: f32[64,128], index: 8, kind: input, shape index: {}]
  %s9 = inlined_call_operand.vmem [shape: f32[1,128], index: 9, kind: input, shape index: {}]
  %s10 = inlined_call_operand.vmem [shape: f32[16,2], index: 10, kind: input, shape index: {}]
  %s11 = inlined_call_operand.vmem [shape: f32[16,1], index: 11, kind: input, shape index: {}]
  %s12 = inlined_call_operand.vmem [shape: f32[128,16], index: 12, kind: input, shape index: {}]
  %s13 = inlined_call_operand.vmem [shape: f32[128,1], index: 13, kind: input, shape index: {}]
  %s14 = inlined_call_operand.vmem [shape: f32[64,128], index: 14, kind: input, shape index: {}]
  %s15 = inlined_call_operand.vmem [shape: f32[64,1], index: 15, kind: input, shape index: {}]
  %s16 = inlined_call_operand.vmem [shape: f32[8,64], index: 16, kind: input, shape index: {}]
  %s17 = inlined_call_operand.vmem [shape: f32[8,1], index: 17, kind: input, shape index: {}]
  %s18 = inlined_call_operand.hbm [shape: f32[8,128], index: 18, kind: output, shape index: {}]
  %s19 = sld [smem:[#allocation0]]
  $region78: #{tpu_custom_call.1} parent=0
    _
  %s21 = ssub.s32 1, %s19
  %s22 = scalar_select 0, %s21, %s19
  %s23 = sshll.u32 %s0, 4
  %s24 = int_to_ptr.vmem [resolvable:$true] %s23
  %26 = dma.vmem_to_smem %s24, 16, [#allocation3], [#allocation2]
  %27 = dma.done [#allocation2], 16
  %28 = sfence
  $region1: #{tpu_custom_call.1} parent=0
    #allocation4 [shape = 'u8[4096]{0}', space=vmem, size = 0x1000, scoped, tag = 'output window, operand 0, single buffered']
    #allocation5 [shape = 's32[1]{0}', space=sflag, size = 0x4, scoped, tag = 'scoped memory for tpu_custom_call.1']
    %29 = vsyncpa [#allocation5], 0
    // Predicated region
    $region2: #{tpu_custom_call.1} parent=1 // pred_check
      _
    $region3: #{tpu_custom_call.1} parent=1 // pred_check_branch
      %31 = sbr.rel (0) target = $region5
    $region4: #{tpu_custom_call.1} parent=1 // pred_region
      _
    $region5: #{tpu_custom_call.1} parent=1 // pred_fallthru
      _
    // Predicated region
    $region6: #{tpu_custom_call.1} parent=1 // pred_check
      _
    $region7: #{tpu_custom_call.1} parent=1 // pred_check_branch
      %33 = sbr.rel (0) target = $region9
    $region8: #{tpu_custom_call.1} parent=1 // pred_region
      _
    $region9: #{tpu_custom_call.1} parent=1 // pred_fallthru
      _
    // Predicated region
    $region10: #{tpu_custom_call.1} parent=1 // pred_check
      _
    $region11: #{tpu_custom_call.1} parent=1 // pred_check_branch
      %35 = sbr.rel (0) target = $region13
    $region12: #{tpu_custom_call.1} parent=1 // pred_region
      _
    $region13: #{tpu_custom_call.1} parent=1 // pred_fallthru
      _
    // Predicated region
    $region14: #{tpu_custom_call.1} parent=1 // pred_check
      _
    $region15: #{tpu_custom_call.1} parent=1 // pred_check_branch
      %37 = sbr.rel (0) target = $region17
    $region16: #{tpu_custom_call.1} parent=1 // pred_region
      _
    $region17: #{tpu_custom_call.1} parent=1 // pred_fallthru
      _
    // Predicated region
    $region18: #{tpu_custom_call.1} parent=1 // pred_check
      _
    $region19: #{tpu_custom_call.1} parent=1 // pred_check_branch
      %39 = sbr.rel (0) target = $region21
    $region20: #{tpu_custom_call.1} parent=1 // pred_region
      _
    $region21: #{tpu_custom_call.1} parent=1 // pred_fallthru
      _
    // Predicated region
    $region22: #{tpu_custom_call.1} parent=1 // pred_check
      _
    $region23: #{tpu_custom_call.1} parent=1 // pred_check_branch
      %41 = sbr.rel (0) target = $region25
    $region24: #{tpu_custom_call.1} parent=1 // pred_region
      _
    $region25: #{tpu_custom_call.1} parent=1 // pred_fallthru
      _
    // Predicated region
    $region26: #{tpu_custom_call.1} parent=1 // pred_check
      _
    $region27: #{tpu_custom_call.1} parent=1 // pred_check_branch
      %43 = sbr.rel (0) target = $region29
    $region28: #{tpu_custom_call.1} parent=1 // pred_region
      _
    $region29: #{tpu_custom_call.1} parent=1 // pred_fallthru
      _
    // Predicated region
    $region30: #{tpu_custom_call.1} parent=1 // pred_check
      _
    $region31: #{tpu_custom_call.1} parent=1 // pred_check_branch
      %45 = sbr.rel (0) target = $region33
    $region32: #{tpu_custom_call.1} parent=1 // pred_region
      _
    $region33: #{tpu_custom_call.1} parent=1 // pred_fallthru
      _
    // Predicated region
    $region34: #{tpu_custom_call.1} parent=1 // pred_check
      _
    $region35: #{tpu_custom_call.1} parent=1 // pred_check_branch
      %47 = sbr.rel (0) target = $region37
    $region36: #{tpu_custom_call.1} parent=1 // pred_region
      _
    $region37: #{tpu_custom_call.1} parent=1 // pred_fallthru
      _
    // Predicated region
    $region38: #{tpu_custom_call.1} parent=1 // pred_check
      _
    $region39: #{tpu_custom_call.1} parent=1 // pred_check_branch
      %49 = sbr.rel (0) target = $region41
    $region40: #{tpu_custom_call.1} parent=1 // pred_region
      _
    $region41: #{tpu_custom_call.1} parent=1 // pred_fallthru
      _
    // Predicated region
    $region42: #{tpu_custom_call.1} parent=1 // pred_check
      _
    $region43: #{tpu_custom_call.1} parent=1 // pred_check_branch
      %51 = sbr.rel (0) target = $region45
    $region44: #{tpu_custom_call.1} parent=1 // pred_region
      _
    $region45: #{tpu_custom_call.1} parent=1 // pred_fallthru
      _
    // Predicated region
    $region46: #{tpu_custom_call.1} parent=1 // pred_check
      _
    $region47: #{tpu_custom_call.1} parent=1 // pred_check_branch
      %53 = sbr.rel (0) target = $region49
    $region48: #{tpu_custom_call.1} parent=1 // pred_region
      _
    $region49: #{tpu_custom_call.1} parent=1 // pred_fallthru
      _
    // Predicated region
    $region50: #{tpu_custom_call.1} parent=1 // pred_check
      _
    $region51: #{tpu_custom_call.1} parent=1 // pred_check_branch
      %55 = sbr.rel (0) target = $region53
    $region52: #{tpu_custom_call.1} parent=1 // pred_region
      _
    $region53: #{tpu_custom_call.1} parent=1 // pred_fallthru
      _
    // Predicated region
    $region54: #{tpu_custom_call.1} parent=1 // pred_check
      _
    $region55: #{tpu_custom_call.1} parent=1 // pred_check_branch
      %57 = sbr.rel (0) target = $region57
    $region56: #{tpu_custom_call.1} parent=1 // pred_region
      _
    $region57: #{tpu_custom_call.1} parent=1 // pred_fallthru
      _
    // Predicated region
    $region58: #{tpu_custom_call.1} parent=1 // pred_check
      _
    $region59: #{tpu_custom_call.1} parent=1 // pred_check_branch
      %59 = sbr.rel (0) target = $region61
    $region60: #{tpu_custom_call.1} parent=1 // pred_region
      _
    $region61: #{tpu_custom_call.1} parent=1 // pred_fallthru
      _
    // Predicated region
    $region62: #{tpu_custom_call.1} parent=1 // pred_check
      _
    $region63: #{tpu_custom_call.1} parent=1 // pred_check_branch
      %61 = sbr.rel (0) target = $region65
    $region64: #{tpu_custom_call.1} parent=1 // pred_region
      _
    $region65: #{tpu_custom_call.1} parent=1 // pred_fallthru
      _
    // Predicated region
    $region66: #{tpu_custom_call.1} parent=1 // pred_check
      _
    $region67: #{tpu_custom_call.1} parent=1 // pred_check_branch
      %63 = sbr.rel (0) target = $region69
    $region68: #{tpu_custom_call.1} parent=1 // pred_region
      _
    $region69: #{tpu_custom_call.1} parent=1 // pred_fallthru
      _
    %s64 = sld [smem:[#allocation3]]
    %s65 = sld [smem:[#allocation3 + $0x1]]
    %s66 = sld [smem:[#allocation3 + $0x2]]
    %s67 = sld [smem:[#allocation3 + $0x3]]
    %s68 = sld [smem:[#allocation3 + $0x4]]
    %s69 = sld [smem:[#allocation3 + $0x5]]
    %v70 = vld [vmem:[%s2] sm:$0x3]
    %v71 = vld [vmem:[%s3] ss:$2 sm:$0x3]
    %v72 = vsub.f32 %v70, %v71
    %s73 = scalar_lea.vmem %s3, 1
    %v74 = vld [vmem:[%s73] ss:$2 sm:$0x3]
    %v75 = vrcp.pop %v74
    %v76 = vmul.f32 %v72, %v75
    %v77 = vld [vmem:[%s4] sm:$0xff]
    %v78 = vld [vmem:[%s4 + $0x8] sm:$0xff]
    %v79 = vld [vmem:[%s4 + $0x10] sm:$0xff]
    %v80 = vld [vmem:[%s4 + $0x18] sm:$0xff]
    %v81 = vld [vmem:[%s4 + $0x20] sm:$0xff]
    %v82 = vld [vmem:[%s4 + $0x28] sm:$0xff]
    %v83 = vld [vmem:[%s4 + $0x30] sm:$0xff]
    %v84 = vld [vmem:[%s4 + $0x38] sm:$0xff]
    %v85 = vld [vmem:[%s4 + $0x40] sm:$0xff]
    %v86 = vld [vmem:[%s4 + $0x48] sm:$0xff]
    %v87 = vld [vmem:[%s4 + $0x50] sm:$0xff]
    %v88 = vld [vmem:[%s4 + $0x58] sm:$0xff]
    %v89 = vld [vmem:[%s4 + $0x60] sm:$0xff]
    %v90 = vld [vmem:[%s4 + $0x68] sm:$0xff]
    %v91 = vld [vmem:[%s4 + $0x70] sm:$0xff]
    %v92 = vld [vmem:[%s4 + $0x78] sm:$0xff]
    %v93 = vld [vmem:[%s4 + $0x80] sm:$0xff]
    %v94 = vld [vmem:[%s5] sm:$0x1]
    %v96 = vlaneseq
    %v97 = vshrl.u32 %v96, 7
    %v98 = vsub.s32 0, %v97
    %v99 = vrot.slane %v76, %v98
    %v100 = vlaneseq
    %v101 = vshrl.u32 %v100, 7
    %v102 = vsub.s32 1, %v101
    %v103 = vrot.slane %v76, %v102
    %vm105 = vcmask 64512
    %v106 = vsel %vm105, %v103, 0
    %108 = vmatprep.subr.mxu0 0.0
    %109 = vmatpush1.msra.mxu0 %v77
    %110 = vmatprep.subr.mxu0 0.0
    %111 = vmatpush1.msra.mxu0 %v78
    %112 = vmatprep.subr.mxu0 0.0
    %113 = vmatpush1.msra.mxu0 %v79
    %114 = vmatprep.subr.mxu0 0.0
    %115 = vmatpush1.msra.mxu0 %v80
    %116 = vmatprep.subr.mxu0 0.0
    %117 = vmatpush1.msra.mxu0 %v81
    %118 = vmatprep.subr.mxu0 0.0
    %119 = vmatpush1.msra.mxu0 %v82
    %120 = vmatprep.subr.mxu0 0.0
    %121 = vmatpush1.msra.mxu0 %v83
    %122 = vmatprep.subr.mxu0 0.0
    %123 = vmatpush1.msra.mxu0 %v84
    %124 = vmatprep.subr.mxu0 0.0
    %125 = vmatpush1.msra.mxu0 %v85
    %126 = vmatprep.subr.mxu0 0.0
    %127 = vmatpush1.msra.mxu0 %v86
    %128 = vmatprep.subr.mxu0 0.0
    %129 = vmatpush1.msra.mxu0 %v87
    %130 = vmatprep.subr.mxu0 0.0
    %131 = vmatpush1.msra.mxu0 %v88
    %132 = vmatprep.subr.mxu0 0.0
    %133 = vmatpush1.msra.mxu0 %v89
    %134 = vmatprep.subr.mxu0 0.0
    %135 = vmatpush1.msra.mxu0 %v90
    %136 = vmatprep.subr.mxu0 0.0
    %137 = vmatpush1.msra.mxu0 %v91
    %138 = vmatprep.subr.mxu0 0.0
    %139 = vmatpush1.msra.mxu0 %v92
    %140 = vmatprep.subr.mxu0 0.0
    %141 = vmatpush1.msra.mxu0 %v93
    %142 = vmatprep.subr.mxu0 0.0
    %143 = vmatpush1.msra.mxu0 0.0
    %144 = vmatprep.subr.mxu0 0.0
    %145 = vmatpush1.msra.mxu0 0.0
    %146 = vmatprep.subr.mxu0 0.0
    %147 = vmatpush1.msra.mxu0 0.0
    %148 = vmatprep.subr.mxu0 0.0
    %149 = vmatpush1.msra.mxu0 0.0
    %150 = vmatprep.subr.mxu0 0.0
    %151 = vmatpush1.msra.mxu0 0.0
    %152 = vmatprep.subr.mxu0 0.0
    %153 = vmatpush1.msra.mxu0 0.0
    %154 = vmatprep.subr.mxu0 0.0
    %155 = vmatpush1.msra.mxu0 0.0
    %156 = vmatprep.subr.mxu0 0.0
    %157 = vmatpush1.msra.mxu0 0.0
    %158 = vmatprep.subr.mxu0 0.0
    %159 = vmatpush1.msra.mxu0 0.0
    %160 = vmatprep.subr.mxu0 0.0
    %161 = vmatpush1.msra.mxu0 0.0
    %162 = vmatprep.subr.mxu0 0.0
    %163 = vmatpush1.msra.mxu0 0.0
    %164 = vmatprep.subr.mxu0 0.0
    %165 = vmatpush1.msra.mxu0 0.0
    %166 = vmatprep.subr.mxu0 0.0
    %167 = vmatpush1.msra.mxu0 0.0
    %168 = vmatprep.subr.mxu0 0.0
    %169 = vmatpush1.msra.mxu0 0.0
    %170 = vmatprep.subr.mxu0 0.0
    %171 = vmatpush1.msra.mxu0 0.0
    %172 = vmatprep.mubr.f32.mxu0 %v106
    %173 = vmatmul.mubr.f32.gmra.mrb[0].mxu0 %v99
    %v174 = vpop.f32.mrb[0].mxu0
    %v175 = vadd.f32 %v94, %v174
    %v176 = vpop.f32.mrb[0].mxu0
    %177 = vdwg.mxu0
    %s178 = smul.f32 %s64, 0.5
    %v179 = vstv %s178
    %v180 = vmul.f32 %v179, %v175
    %v181 = vtanh.pop %v180
    %v182 = vadd.f32 %v181, 1.0
    %v183 = vmul.f32 %v182, 0.5
    %v184 = vmul.f32 %v175, %v183
    %v185 = vld [vmem:[%s6] sm:$0xff]
    %v186 = vld [vmem:[%s6 + $0x8] sm:$0xff]
    %v187 = vld [vmem:[%s6 + $0x10] sm:$0xff]
    %v188 = vld [vmem:[%s6 + $0x18] sm:$0xff]
    %v189 = vld [vmem:[%s6 + $0x20] sm:$0xff]
    %v190 = vld [vmem:[%s6 + $0x28] sm:$0xff]
    %v191 = vld [vmem:[%s6 + $0x30] sm:$0xff]
    %v192 = vld [vmem:[%s6 + $0x38] sm:$0xff]
    %v193 = vld [vmem:[%s6 + $0x40] sm:$0xff]
    %v194 = vld [vmem:[%s6 + $0x48] sm:$0xff]
    %v195 = vld [vmem:[%s6 + $0x50] sm:$0xff]
    %v196 = vld [vmem:[%s6 + $0x58] sm:$0xff]
    %v197 = vld [vmem:[%s6 + $0x60] sm:$0xff]
    %v198 = vld [vmem:[%s6 + $0x68] sm:$0xff]
    %v199 = vld [vmem:[%s6 + $0x70] sm:$0xff]
    %v200 = vld [vmem:[%s6 + $0x78] sm:$0xff]
    %v201 = vld [vmem:[%s7] sm:$0x1]
    %202 = vmatprep.subr.mxu0 0.0
    %203 = vmatpush1.msra.mxu0 %v185
    %204 = vmatprep.subr.mxu0 0.0
    %205 = vmatpush1.msra.mxu0 %v186
    %206 = vmatprep.subr.mxu0 0.0
    %207 = vmatpush1.msra.mxu0 %v187
    %208 = vmatprep.subr.mxu0 0.0
    %209 = vmatpush1.msra.mxu0 %v188
    %210 = vmatprep.subr.mxu0 0.0
    %211 = vmatpush1.msra.mxu0 %v189
    %212 = vmatprep.subr.mxu0 0.0
    %213 = vmatpush1.msra.mxu0 %v190
    %214 = vmatprep.subr.mxu0 0.0
    %215 = vmatpush1.msra.mxu0 %v191
    %216 = vmatprep.subr.mxu0 0.0
    %217 = vmatpush1.msra.mxu0 %v192
    %218 = vmatprep.subr.mxu0 0.0
    %219 = vmatpush1.msra.mxu0 %v193
    %220 = vmatprep.subr.mxu0 0.0
    %221 = vmatpush1.msra.mxu0 %v194
    %222 = vmatprep.subr.mxu0 0.0
    %223 = vmatpush1.msra.mxu0 %v195
    %224 = vmatprep.subr.mxu0 0.0
    %225 = vmatpush1.msra.mxu0 %v196
    %226 = vmatprep.subr.mxu0 0.0
    %227 = vmatpush1.msra.mxu0 %v197
    %228 = vmatprep.subr.mxu0 0.0
    %229 = vmatpush1.msra.mxu0 %v198
    %230 = vmatprep.subr.mxu0 0.0
    %231 = vmatpush1.msra.mxu0 %v199
    %232 = vmatprep.subr.mxu0 0.0
    %233 = vmatpush1.msra.mxu0 %v200
    %234 = vmatprep.subr.mxu0 0.0
    %235 = vmatpush1.msra.mxu0 0.0
    %236 = vmatprep.subr.mxu0 0.0
    %237 = vmatpush1.msra.mxu0 0.0
    %238 = vmatprep.subr.mxu0 0.0
    %239 = vmatpush1.msra.mxu0 0.0
    %240 = vmatprep.subr.mxu0 0.0
    %241 = vmatpush1.msra.mxu0 0.0
    %242 = vmatprep.subr.mxu0 0.0
    %243 = vmatpush1.msra.mxu0 0.0
    %244 = vmatprep.subr.mxu0 0.0
    %245 = vmatpush1.msra.mxu0 0.0
    %246 = vmatprep.subr.mxu0 0.0
    %247 = vmatpush1.msra.mxu0 0.0
    %248 = vmatprep.subr.mxu0 0.0
    %249 = vmatpush1.msra.mxu0 0.0
    %250 = vmatprep.subr.mxu0 0.0
    %251 = vmatpush1.msra.mxu0 0.0
    %252 = vmatprep.subr.mxu0 0.0
    %253 = vmatpush1.msra.mxu0 0.0
    %254 = vmatprep.subr.mxu0 0.0
    %255 = vmatpush1.msra.mxu0 0.0
    %256 = vmatprep.subr.mxu0 0.0
    %257 = vmatpush1.msra.mxu0 0.0
    %258 = vmatprep.subr.mxu0 0.0
    %259 = vmatpush1.msra.mxu0 0.0
    %260 = vmatprep.subr.mxu0 0.0
    %261 = vmatpush1.msra.mxu0 0.0
    %262 = vmatprep.subr.mxu0 0.0
    %263 = vmatpush1.msra.mxu0 0.0
    %264 = vmatprep.subr.mxu0 0.0
    %265 = vmatpush1.msra.mxu0 0.0
    %266 = vmatprep.mubr.f32.mxu0 0.0
    %267 = vmatmul.mubr.f32.gmra.mrb[0].mxu0 %v184
    %v268 = vpop.f32.mrb[0].mxu0
    %v269 = vadd.f32 %v201, %v268
    %v270 = vpop.f32.mrb[0].mxu0
    %271 = vdwg.mxu0
    %s272 = smul.f32 %s65, 0.5
    %v273 = vstv %s272
    %v274 = vmul.f32 %v273, %v269
    %v275 = vtanh.pop %v274
    %v276 = vadd.f32 %v275, 1.0
    %v277 = vmul.f32 %v276, 0.5
    %v278 = vmul.f32 %v269, %v277
    %v279 = vld [vmem:[%s8] sm:$0xff]
    %v280 = vld [vmem:[%s8 + $0x8] sm:$0xff]
    %v281 = vld [vmem:[%s8 + $0x10] sm:$0xff]
    %v282 = vld [vmem:[%s8 + $0x18] sm:$0xff]
    %v283 = vld [vmem:[%s8 + $0x20] sm:$0xff]
    %v284 = vld [vmem:[%s8 + $0x28] sm:$0xff]
    %v285 = vld [vmem:[%s8 + $0x30] sm:$0xff]
    %v286 = vld [vmem:[%s8 + $0x38] sm:$0xff]
    %v287 = vld [vmem:[%s9] sm:$0x1]
    %vm288 = vcmask 523264
    %v290 = vsel %vm288, %v278, 0
    %292 = vmatprep.subr.mxu0 0.0
    %293 = vmatpush1.msra.mxu0 %v279
    %294 = vmatprep.subr.mxu0 0.0
    %295 = vmatpush1.msra.mxu0 %v280
    %296 = vmatprep.subr.mxu0 0.0
    %297 = vmatpush1.msra.mxu0 %v281
    %298 = vmatprep.subr.mxu0 0.0
    %299 = vmatpush1.msra.mxu0 %v282
    %300 = vmatprep.subr.mxu0 0.0
    %301 = vmatpush1.msra.mxu0 %v283
    %302 = vmatprep.subr.mxu0 0.0
    %303 = vmatpush1.msra.mxu0 %v284
    %304 = vmatprep.subr.mxu0 0.0
    %305 = vmatpush1.msra.mxu0 %v285
    %306 = vmatprep.subr.mxu0 0.0
    %307 = vmatpush1.msra.mxu0 %v286
    %308 = vmatprep.subr.mxu0 0.0
    %309 = vmatpush1.msra.mxu0 0.0
    %310 = vmatprep.subr.mxu0 0.0
    %311 = vmatpush1.msra.mxu0 0.0
    %312 = vmatprep.subr.mxu0 0.0
    %313 = vmatpush1.msra.mxu0 0.0
    %314 = vmatprep.subr.mxu0 0.0
    %315 = vmatpush1.msra.mxu0 0.0
    %316 = vmatprep.subr.mxu0 0.0
    %317 = vmatpush1.msra.mxu0 0.0
    %318 = vmatprep.subr.mxu0 0.0
    %319 = vmatpush1.msra.mxu0 0.0
    %320 = vmatprep.subr.mxu0 0.0
    %321 = vmatpush1.msra.mxu0 0.0
    %322 = vmatprep.subr.mxu0 0.0
    %323 = vmatpush1.msra.mxu0 0.0
    %324 = vmatprep.subr.mxu0 0.0
    %325 = vmatpush1.msra.mxu0 0.0
    %326 = vmatprep.subr.mxu0 0.0
    %327 = vmatpush1.msra.mxu0 0.0
    %328 = vmatprep.subr.mxu0 0.0
    %329 = vmatpush1.msra.mxu0 0.0
    %330 = vmatprep.subr.mxu0 0.0
    %331 = vmatpush1.msra.mxu0 0.0
    %332 = vmatprep.subr.mxu0 0.0
    %333 = vmatpush1.msra.mxu0 0.0
    %334 = vmatprep.subr.mxu0 0.0
    %335 = vmatpush1.msra.mxu0 0.0
    %336 = vmatprep.subr.mxu0 0.0
    %337 = vmatpush1.msra.mxu0 0.0
    %338 = vmatprep.subr.mxu0 0.0
    %339 = vmatpush1.msra.mxu0 0.0
    %340 = vmatprep.subr.mxu0 0.0
    %341 = vmatpush1.msra.mxu0 0.0
    %342 = vmatprep.subr.mxu0 0.0
    %343 = vmatpush1.msra.mxu0 0.0
    %344 = vmatprep.subr.mxu0 0.0
    %345 = vmatpush1.msra.mxu0 0.0
    %346 = vmatprep.subr.mxu0 0.0
    %347 = vmatpush1.msra.mxu0 0.0
    %348 = vmatprep.subr.mxu0 0.0
    %349 = vmatpush1.msra.mxu0 0.0
    %350 = vmatprep.subr.mxu0 0.0
    %351 = vmatpush1.msra.mxu0 0.0
    %352 = vmatprep.subr.mxu0 0.0
    %353 = vmatpush1.msra.mxu0 0.0
    %354 = vmatprep.subr.mxu0 0.0
    %355 = vmatpush1.msra.mxu0 0.0
    %356 = vmatprep.mubr.f32.mxu0 0.0
    %357 = vmatmul.mubr.f32.gmra.mrb[0].mxu0 %v290
    %v358 = vpop.f32.mrb[0].mxu0
    %v359 = vadd.f32 %v287, %v358
    %v360 = vpop.f32.mrb[0].mxu0
    %361 = vdwg.mxu0
    %v362 = vtanh.pop %v359
    %v363 = vld [vmem:[%s1] sm:$0x3]
    %v364 = vld [vmem:[%s10] sm:$0xff]
    %v365 = vld [vmem:[%s10 + $0x8] sm:$0xff]
    %367 = vset.pattern.permute.xlu0 0
    %368 = vperm.xlu0 %367, %v364
    %v369 = vpop.permute.xlu0 %368
    %372 = vset.pattern.permute.xlu0 0
    %373 = vperm.xlu0 %372, %v365
    %v374 = vpop.permute.xlu0 %373
    %v376 = vlaneseq
    %v377 = vshrl.u32 %v376, 7
    %v378 = vsub.s32 0, %v377
    %v379 = vrot.slane %v363, %v378
    %v380 = vmul.f32 %v369, %v379
    %v381 = vmul.f32 %v374, %v379
    %382 = vset.pattern.permute.xlu0 1
    %383 = vperm.xlu0 %382, %v364
    %v384 = vpop.permute.xlu0 %383
    %386 = vset.pattern.permute.xlu0 1
    %387 = vperm.xlu0 %386, %v365
    %v388 = vpop.permute.xlu0 %387
    %v390 = vlaneseq
    %v391 = vshrl.u32 %v390, 7
    %v392 = vsub.s32 1, %v391
    %v393 = vrot.slane %v363, %v392
    %v394 = vmul.f32 %v384, %v393
    %v395 = vmul.f32 %v388, %v393
    %v396 = vadd.f32 %v380, %v394
    %v397 = vadd.f32 %v381, %v395
    %v398 = vld [vmem:[%s11] sm:$0xff]
    %v399 = vld [vmem:[%s11 + $0x8] sm:$0xff]
    %401 = vset.pattern.permute.xlu0 0
    %402 = vperm.xlu0 %401, %v398
    %v403 = vpop.permute.xlu0 %402
    %406 = vset.pattern.permute.xlu0 0
    %407 = vperm.xlu0 %406, %v399
    %v408 = vpop.permute.xlu0 %407
    %v410 = vadd.f32 %v396, %v403
    %v411 = vadd.f32 %v397, %v408
    %s412 = smul.f32 %s66, 0.5
    %v413 = vstv %s412
    %v414 = vmul.f32 %v413, %v410
    %v415 = vmul.f32 %v413, %v411
    %v416 = vtanh.pop %v414
    %v417 = vtanh.pop %v415
    %v418 = vadd.f32 %v416, 1.0
    %v419 = vadd.f32 %v417, 1.0
    %v420 = vmul.f32 %v418, 0.5
    %v421 = vmul.f32 %v419, 0.5
    %v422 = vmul.f32 %v410, %v420
    %v423 = vmul.f32 %v411, %v421
    %v424 = vld [vmem:[%s12] sm:$0xff]
    %v425 = vld [vmem:[%s12 + $0x8] sm:$0xff]
    %v426 = vld [vmem:[%s12 + $0x10] sm:$0xff]
    %v427 = vld [vmem:[%s12 + $0x18] sm:$0xff]
    %v428 = vld [vmem:[%s12 + $0x20] sm:$0xff]
    %v429 = vld [vmem:[%s12 + $0x28] sm:$0xff]
    %v430 = vld [vmem:[%s12 + $0x30] sm:$0xff]
    %v431 = vld [vmem:[%s12 + $0x38] sm:$0xff]
    %v432 = vld [vmem:[%s12 + $0x40] sm:$0xff]
    %v433 = vld [vmem:[%s12 + $0x48] sm:$0xff]
    %v434 = vld [vmem:[%s12 + $0x50] sm:$0xff]
    %v435 = vld [vmem:[%s12 + $0x58] sm:$0xff]
    %v436 = vld [vmem:[%s12 + $0x60] sm:$0xff]
    %v437 = vld [vmem:[%s12 + $0x68] sm:$0xff]
    %v438 = vld [vmem:[%s12 + $0x70] sm:$0xff]
    %v439 = vld [vmem:[%s12 + $0x78] sm:$0xff]
    %v440 = vld [vmem:[%s13] sm:$0xff]
    %v441 = vld [vmem:[%s13 + $0x8] sm:$0xff]
    %v442 = vld [vmem:[%s13 + $0x10] sm:$0xff]
    %v443 = vld [vmem:[%s13 + $0x18] sm:$0xff]
    %v444 = vld [vmem:[%s13 + $0x20] sm:$0xff]
    %v445 = vld [vmem:[%s13 + $0x28] sm:$0xff]
    %v446 = vld [vmem:[%s13 + $0x30] sm:$0xff]
    %v447 = vld [vmem:[%s13 + $0x38] sm:$0xff]
    %v448 = vld [vmem:[%s13 + $0x40] sm:$0xff]
    %v449 = vld [vmem:[%s13 + $0x48] sm:$0xff]
    %v450 = vld [vmem:[%s13 + $0x50] sm:$0xff]
    %v451 = vld [vmem:[%s13 + $0x58] sm:$0xff]
    %v452 = vld [vmem:[%s13 + $0x60] sm:$0xff]
    %v453 = vld [vmem:[%s13 + $0x68] sm:$0xff]
    %v454 = vld [vmem:[%s13 + $0x70] sm:$0xff]
    %v455 = vld [vmem:[%s13 + $0x78] sm:$0xff]
    %457 = vset.pattern.permute.xlu0 0
    %458 = vperm.xlu0 %457, %v440
    %v459 = vpop.permute.xlu0 %458
    %462 = vset.pattern.permute.xlu0 0
    %463 = vperm.xlu0 %462, %v441
    %v464 = vpop.permute.xlu0 %463
    %467 = vset.pattern.permute.xlu0 0
    %468 = vperm.xlu0 %467, %v442
    %v469 = vpop.permute.xlu0 %468
    %472 = vset.pattern.permute.xlu0 0
    %473 = vperm.xlu0 %472, %v443
    %v474 = vpop.permute.xlu0 %473
    %477 = vset.pattern.permute.xlu0 0
    %478 = vperm.xlu0 %477, %v444
    %v479 = vpop.permute.xlu0 %478
    %482 = vset.pattern.permute.xlu0 0
    %483 = vperm.xlu0 %482, %v445
    %v484 = vpop.permute.xlu0 %483
    %487 = vset.pattern.permute.xlu0 0
    %488 = vperm.xlu0 %487, %v446
    %v489 = vpop.permute.xlu0 %488
    %492 = vset.pattern.permute.xlu0 0
    %493 = vperm.xlu0 %492, %v447
    %v494 = vpop.permute.xlu0 %493
    %497 = vset.pattern.permute.xlu0 0
    %498 = vperm.xlu0 %497, %v448
    %v499 = vpop.permute.xlu0 %498
    %502 = vset.pattern.permute.xlu0 0
    %503 = vperm.xlu0 %502, %v449
    %v504 = vpop.permute.xlu0 %503
    %507 = vset.pattern.permute.xlu0 0
    %508 = vperm.xlu0 %507, %v450
    %v509 = vpop.permute.xlu0 %508
    %512 = vset.pattern.permute.xlu0 0
    %513 = vperm.xlu0 %512, %v451
    %v514 = vpop.permute.xlu0 %513
    %517 = vset.pattern.permute.xlu0 0
    %518 = vperm.xlu0 %517, %v452
    %v519 = vpop.permute.xlu0 %518
    %522 = vset.pattern.permute.xlu0 0
    %523 = vperm.xlu0 %522, %v453
    %v524 = vpop.permute.xlu0 %523
    %527 = vset.pattern.permute.xlu0 0
    %528 = vperm.xlu0 %527, %v454
    %v529 = vpop.permute.xlu0 %528
    %532 = vset.pattern.permute.xlu0 0
    %533 = vperm.xlu0 %532, %v455
    %v534 = vpop.permute.xlu0 %533
    %vm536 = vcmask 130048
    %v538 = vsel %vm536, %v424, 0
    %v541 = vsel %vm536, %v425, 0
    %v544 = vsel %vm536, %v426, 0
    %v547 = vsel %vm536, %v427, 0
    %v550 = vsel %vm536, %v428, 0
    %v553 = vsel %vm536, %v429, 0
    %v556 = vsel %vm536, %v430, 0
    %v559 = vsel %vm536, %v431, 0
    %v562 = vsel %vm536, %v432, 0
    %v565 = vsel %vm536, %v433, 0
    %v568 = vsel %vm536, %v434, 0
    %v571 = vsel %vm536, %v435, 0
    %v574 = vsel %vm536, %v436, 0
    %v577 = vsel %vm536, %v437, 0
    %v580 = vsel %vm536, %v438, 0
    %v583 = vsel %vm536, %v439, 0
    %585 = vmatprep.subr.mxu0 0.0
    %586 = vmatpush1.msra.mxu0 %v422
    %587 = vmatprep.subr.mxu0 0.0
    %588 = vmatpush1.msra.mxu0 %v423
    %589 = vmatprep.subr.mxu0 0.0
    %590 = vmatpush1.msra.mxu0 0.0
    %591 = vmatprep.subr.mxu0 0.0
    %592 = vmatpush1.msra.mxu0 0.0
    %593 = vmatprep.subr.mxu0 0.0
    %594 = vmatpush1.msra.mxu0 0.0
    %595 = vmatprep.subr.mxu0 0.0
    %596 = vmatpush1.msra.mxu0 0.0
    %597 = vmatprep.subr.mxu0 0.0
    %598 = vmatpush1.msra.mxu0 0.0
    %599 = vmatprep.subr.mxu0 0.0
    %600 = vmatpush1.msra.mxu0 0.0
    %601 = vmatprep.subr.mxu0 0.0
    %602 = vmatpush1.msra.mxu0 0.0
    %603 = vmatprep.subr.mxu0 0.0
    %604 = vmatpush1.msra.mxu0 0.0
    %605 = vmatprep.subr.mxu0 0.0
    %606 = vmatpush1.msra.mxu0 0.0
    %607 = vmatprep.subr.mxu0 0.0
    %608 = vmatpush1.msra.mxu0 0.0
    %609 = vmatprep.subr.mxu0 0.0
    %610 = vmatpush1.msra.mxu0 0.0
    %611 = vmatprep.subr.mxu0 0.0
    %612 = vmatpush1.msra.mxu0 0.0
    %613 = vmatprep.subr.mxu0 0.0
    %614 = vmatpush1.msra.mxu0 0.0
    %615 = vmatprep.subr.mxu0 0.0
    %616 = vmatpush1.msra.mxu0 0.0
    %617 = vmatprep.subr.mxu0 0.0
    %618 = vmatpush1.msra.mxu0 0.0
    %619 = vmatprep.subr.mxu0 0.0
    %620 = vmatpush1.msra.mxu0 0.0
    %621 = vmatprep.subr.mxu0 0.0
    %622 = vmatpush1.msra.mxu0 0.0
    %623 = vmatprep.subr.mxu0 0.0
    %624 = vmatpush1.msra.mxu0 0.0
    %625 = vmatprep.subr.mxu0 0.0
    %626 = vmatpush1.msra.mxu0 0.0
    %627 = vmatprep.subr.mxu0 0.0
    %628 = vmatpush1.msra.mxu0 0.0
    %629 = vmatprep.subr.mxu0 0.0
    %630 = vmatpush1.msra.mxu0 0.0
    %631 = vmatprep.subr.mxu0 0.0
    %632 = vmatpush1.msra.mxu0 0.0
    %633 = vmatprep.subr.mxu0 0.0
    %634 = vmatpush1.msra.mxu0 0.0
    %635 = vmatprep.subr.mxu0 0.0
    %636 = vmatpush1.msra.mxu0 0.0
    %637 = vmatprep.subr.mxu0 0.0
    %638 = vmatpush1.msra.mxu0 0.0
    %639 = vmatprep.subr.mxu0 0.0
    %640 = vmatpush1.msra.mxu0 0.0
    %641 = vmatprep.subr.mxu0 0.0
    %642 = vmatpush1.msra.mxu0 0.0
    %643 = vmatprep.subr.mxu0 0.0
    %644 = vmatpush1.msra.mxu0 0.0
    %645 = vmatprep.subr.mxu0 0.0
    %646 = vmatpush1.msra.mxu0 0.0
    %647 = vmatprep.subr.mxu0 0.0
    %648 = vmatpush1.msra.mxu0 0.0
    %649 = vmatprep.mubr.f32.mxu0 0.0
    %650 = vmatmul.mubr.f32.gmra.mrb[0].mxu0 %v538
    %v651 = vpop.f32.mrb[0].mxu0
    %v652 = vadd.f32 %v459, %v651
    %v653 = vpop.f32.mrb[0].mxu0
    %654 = vmatprep.mubr.f32.mxu0 0.0
    %655 = vmatmul.mubr.f32.gmra.mrb[0].mxu0 %v541
    %v656 = vpop.f32.mrb[0].mxu0
    %v657 = vadd.f32 %v464, %v656
    %v658 = vpop.f32.mrb[0].mxu0
    %659 = vmatprep.mubr.f32.mxu0 0.0
    %660 = vmatmul.mubr.f32.gmra.mrb[0].mxu0 %v544
    %v661 = vpop.f32.mrb[0].mxu0
    %v662 = vadd.f32 %v469, %v661
    %v663 = vpop.f32.mrb[0].mxu0
    %664 = vmatprep.mubr.f32.mxu0 0.0
    %665 = vmatmul.mubr.f32.gmra.mrb[0].mxu0 %v547
    %v666 = vpop.f32.mrb[0].mxu0
    %v667 = vadd.f32 %v474, %v666
    %v668 = vpop.f32.mrb[0].mxu0
    %669 = vmatprep.mubr.f32.mxu0 0.0
    %670 = vmatmul.mubr.f32.gmra.mrb[0].mxu0 %v550
    %v671 = vpop.f32.mrb[0].mxu0
    %v672 = vadd.f32 %v479, %v671
    %v673 = vpop.f32.mrb[0].mxu0
    %674 = vmatprep.mubr.f32.mxu0 0.0
    %675 = vmatmul.mubr.f32.gmra.mrb[0].mxu0 %v553
    %v676 = vpop.f32.mrb[0].mxu0
    %v677 = vadd.f32 %v484, %v676
    %v678 = vpop.f32.mrb[0].mxu0
    %679 = vmatprep.mubr.f32.mxu0 0.0
    %680 = vmatmul.mubr.f32.gmra.mrb[0].mxu0 %v556
    %v681 = vpop.f32.mrb[0].mxu0
    %v682 = vadd.f32 %v489, %v681
    %v683 = vpop.f32.mrb[0].mxu0
    %684 = vmatprep.mubr.f32.mxu0 0.0
    %685 = vmatmul.mubr.f32.gmra.mrb[0].mxu0 %v559
    %v686 = vpop.f32.mrb[0].mxu0
    %v687 = vadd.f32 %v494, %v686
    %v688 = vpop.f32.mrb[0].mxu0
    %689 = vmatprep.mubr.f32.mxu0 0.0
    %690 = vmatmul.mubr.f32.gmra.mrb[0].mxu0 %v562
    %v691 = vpop.f32.mrb[0].mxu0
    %v692 = vadd.f32 %v499, %v691
    %v693 = vpop.f32.mrb[0].mxu0
    %694 = vmatprep.mubr.f32.mxu0 0.0
    %695 = vmatmul.mubr.f32.gmra.mrb[0].mxu0 %v565
    %v696 = vpop.f32.mrb[0].mxu0
    %v697 = vadd.f32 %v504, %v696
    %v698 = vpop.f32.mrb[0].mxu0
    %699 = vmatprep.mubr.f32.mxu0 0.0
    %700 = vmatmul.mubr.f32.gmra.mrb[0].mxu0 %v568
    %v701 = vpop.f32.mrb[0].mxu0
    %v702 = vadd.f32 %v509, %v701
    %v703 = vpop.f32.mrb[0].mxu0
    %704 = vmatprep.mubr.f32.mxu0 0.0
    %705 = vmatmul.mubr.f32.gmra.mrb[0].mxu0 %v571
    %v706 = vpop.f32.mrb[0].mxu0
    %v707 = vadd.f32 %v514, %v706
    %v708 = vpop.f32.mrb[0].mxu0
    %709 = vmatprep.mubr.f32.mxu0 0.0
    %710 = vmatmul.mubr.f32.gmra.mrb[0].mxu0 %v574
    %v711 = vpop.f32.mrb[0].mxu0
    %v712 = vadd.f32 %v519, %v711
    %v713 = vpop.f32.mrb[0].mxu0
    %714 = vmatprep.mubr.f32.mxu0 0.0
    %715 = vmatmul.mubr.f32.gmra.mrb[0].mxu0 %v577
    %v716 = vpop.f32.mrb[0].mxu0
    %v717 = vadd.f32 %v524, %v716
    %v718 = vpop.f32.mrb[0].mxu0
    %719 = vmatprep.mubr.f32.mxu0 0.0
    %720 = vmatmul.mubr.f32.gmra.mrb[0].mxu0 %v580
    %v721 = vpop.f32.mrb[0].mxu0
    %v722 = vadd.f32 %v529, %v721
    %v723 = vpop.f32.mrb[0].mxu0
    %724 = vmatprep.mubr.f32.mxu0 0.0
    %725 = vmatmul.mubr.f32.gmra.mrb[0].mxu0 %v583
    %v726 = vpop.f32.mrb[0].mxu0
    %v727 = vadd.f32 %v534, %v726
    %v728 = vpop.f32.mrb[0].mxu0
    %729 = vdwg.mxu0
    %s730 = smul.f32 %s67, 0.5
    %v731 = vstv %s730
    %v732 = vmul.f32 %v731, %v652
    %v733 = vmul.f32 %v731, %v657
    %v734 = vmul.f32 %v731, %v662
    %v735 = vmul.f32 %v731, %v667
    %v736 = vmul.f32 %v731, %v672
    %v737 = vmul.f32 %v731, %v677
    %v738 = vmul.f32 %v731, %v682
    %v739 = vmul.f32 %v731, %v687
    %v740 = vmul.f32 %v731, %v692
    %v741 = vmul.f32 %v731, %v697
    %v742 = vmul.f32 %v731, %v702
    %v743 = vmul.f32 %v731, %v707
    %v744 = vmul.f32 %v731, %v712
    %v745 = vmul.f32 %v731, %v717
    %v746 = vmul.f32 %v731, %v722
    %v747 = vmul.f32 %v731, %v727
    %v748 = vtanh.pop %v732
    %v749 = vtanh.pop %v733
    %v750 = vtanh.pop %v734
    %v751 = vtanh.pop %v735
    %v752 = vtanh.pop %v736
    %v753 = vtanh.pop %v737
    %v754 = vtanh.pop %v738
    %v755 = vtanh.pop %v739
    %v756 = vtanh.pop %v740
    %v757 = vtanh.pop %v741
    %v758 = vtanh.pop %v742
    %v759 = vtanh.pop %v743
    %v760 = vtanh.pop %v744
    %v761 = vtanh.pop %v745
    %v762 = vtanh.pop %v746
    %v763 = vtanh.pop %v747
    %v764 = vadd.f32 %v748, 1.0
    %v765 = vadd.f32 %v749, 1.0
    %v766 = vadd.f32 %v750, 1.0
    %v767 = vadd.f32 %v751, 1.0
    %v768 = vadd.f32 %v752, 1.0
    %v769 = vadd.f32 %v753, 1.0
    %v770 = vadd.f32 %v754, 1.0
    %v771 = vadd.f32 %v755, 1.0
    %v772 = vadd.f32 %v756, 1.0
    %v773 = vadd.f32 %v757, 1.0
    %v774 = vadd.f32 %v758, 1.0
    %v775 = vadd.f32 %v759, 1.0
    %v776 = vadd.f32 %v760, 1.0
    %v777 = vadd.f32 %v761, 1.0
    %v778 = vadd.f32 %v762, 1.0
    %v779 = vadd.f32 %v763, 1.0
    %v780 = vmul.f32 %v764, 0.5
    %v781 = vmul.f32 %v765, 0.5
    %v782 = vmul.f32 %v766, 0.5
    %v783 = vmul.f32 %v767, 0.5
    %v784 = vmul.f32 %v768, 0.5
    %v785 = vmul.f32 %v769, 0.5
    %v786 = vmul.f32 %v770, 0.5
    %v787 = vmul.f32 %v771, 0.5
    %v788 = vmul.f32 %v772, 0.5
    %v789 = vmul.f32 %v773, 0.5
    %v790 = vmul.f32 %v774, 0.5
    %v791 = vmul.f32 %v775, 0.5
    %v792 = vmul.f32 %v776, 0.5
    %v793 = vmul.f32 %v777, 0.5
    %v794 = vmul.f32 %v778, 0.5
    %v795 = vmul.f32 %v779, 0.5
    %v796 = vmul.f32 %v652, %v780
    %v797 = vmul.f32 %v657, %v781
    %v798 = vmul.f32 %v662, %v782
    %v799 = vmul.f32 %v667, %v783
    %v800 = vmul.f32 %v672, %v784
    %v801 = vmul.f32 %v677, %v785
    %v802 = vmul.f32 %v682, %v786
    %v803 = vmul.f32 %v687, %v787
    %v804 = vmul.f32 %v692, %v788
    %v805 = vmul.f32 %v697, %v789
    %v806 = vmul.f32 %v702, %v790
    %v807 = vmul.f32 %v707, %v791
    %v808 = vmul.f32 %v712, %v792
    %v809 = vmul.f32 %v717, %v793
    %v810 = vmul.f32 %v722, %v794
    %v811 = vmul.f32 %v727, %v795
    %v812 = vld [vmem:[%s14] sm:$0xff]
    %v813 = vld [vmem:[%s14 + $0x8] sm:$0xff]
    %v814 = vld [vmem:[%s14 + $0x10] sm:$0xff]
    %v815 = vld [vmem:[%s14 + $0x18] sm:$0xff]
    %v816 = vld [vmem:[%s14 + $0x20] sm:$0xff]
    %v817 = vld [vmem:[%s14 + $0x28] sm:$0xff]
    %v818 = vld [vmem:[%s14 + $0x30] sm:$0xff]
    %v819 = vld [vmem:[%s14 + $0x38] sm:$0xff]
    %v820 = vlaneseq
    %v821 = vshrl.u32 %v820, 7
    %v822 = vsub.s32 0, %v821
    %v823 = vrot.slane %v362, %v822
    %v824 = vmul.f32 %v812, %v823
    %v825 = vmul.f32 %v813, %v823
    %v826 = vmul.f32 %v814, %v823
    %v827 = vmul.f32 %v815, %v823
    %v828 = vmul.f32 %v816, %v823
    %v829 = vmul.f32 %v817, %v823
    %v830 = vmul.f32 %v818, %v823
    %v831 = vmul.f32 %v819, %v823
    %v832 = vld [vmem:[%s15] sm:$0xff]
    %v833 = vld [vmem:[%s15 + $0x8] sm:$0xff]
    %v834 = vld [vmem:[%s15 + $0x10] sm:$0xff]
    %v835 = vld [vmem:[%s15 + $0x18] sm:$0xff]
    %v836 = vld [vmem:[%s15 + $0x20] sm:$0xff]
    %v837 = vld [vmem:[%s15 + $0x28] sm:$0xff]
    %v838 = vld [vmem:[%s15 + $0x30] sm:$0xff]
    %v839 = vld [vmem:[%s15 + $0x38] sm:$0xff]
    %841 = vset.pattern.permute.xlu0 0
    %842 = vperm.xlu0 %841, %v832
    %v843 = vpop.permute.xlu0 %842
    %846 = vset.pattern.permute.xlu0 0
    %847 = vperm.xlu0 %846, %v833
    %v848 = vpop.permute.xlu0 %847
    %851 = vset.pattern.permute.xlu0 0
    %852 = vperm.xlu0 %851, %v834
    %v853 = vpop.permute.xlu0 %852
    %856 = vset.pattern.permute.xlu0 0
    %857 = vperm.xlu0 %856, %v835
    %v858 = vpop.permute.xlu0 %857
    %861 = vset.pattern.permute.xlu0 0
    %862 = vperm.xlu0 %861, %v836
    %v863 = vpop.permute.xlu0 %862
    %866 = vset.pattern.permute.xlu0 0
    %867 = vperm.xlu0 %866, %v837
    %v868 = vpop.permute.xlu0 %867
    %871 = vset.pattern.permute.xlu0 0
    %872 = vperm.xlu0 %871, %v838
    %v873 = vpop.permute.xlu0 %872
    %876 = vset.pattern.permute.xlu0 0
    %877 = vperm.xlu0 %876, %v839
    %v878 = vpop.permute.xlu0 %877
    %880 = vmatprep.subr.mxu0 0.0
    %881 = vmatpush1.msra.mxu0 %v796
    %882 = vmatprep.subr.mxu0 0.0
    %883 = vmatpush1.msra.mxu0 %v797
    %884 = vmatprep.subr.mxu0 0.0
    %885 = vmatpush1.msra.mxu0 %v798
    %886 = vmatprep.subr.mxu0 0.0
    %887 = vmatpush1.msra.mxu0 %v799
    %888 = vmatprep.subr.mxu0 0.0
    %889 = vmatpush1.msra.mxu0 %v800
    %890 = vmatprep.subr.mxu0 0.0
    %891 = vmatpush1.msra.mxu0 %v801
    %892 = vmatprep.subr.mxu0 0.0
    %893 = vmatpush1.msra.mxu0 %v802
    %894 = vmatprep.subr.mxu0 0.0
    %895 = vmatpush1.msra.mxu0 %v803
    %896 = vmatprep.subr.mxu0 0.0
    %897 = vmatpush1.msra.mxu0 %v804
    %898 = vmatprep.subr.mxu0 0.0
    %899 = vmatpush1.msra.mxu0 %v805
    %900 = vmatprep.subr.mxu0 0.0
    %901 = vmatpush1.msra.mxu0 %v806
    %902 = vmatprep.subr.mxu0 0.0
    %903 = vmatpush1.msra.mxu0 %v807
    %904 = vmatprep.subr.mxu0 0.0
    %905 = vmatpush1.msra.mxu0 %v808
    %906 = vmatprep.subr.mxu0 0.0
    %907 = vmatpush1.msra.mxu0 %v809
    %908 = vmatprep.subr.mxu0 0.0
    %909 = vmatpush1.msra.mxu0 %v810
    %910 = vmatprep.subr.mxu0 0.0
    %911 = vmatpush1.msra.mxu0 %v811
    %912 = vmatprep.subr.mxu0 0.0
    %913 = vmatpush1.msra.mxu0 0.0
    %914 = vmatprep.subr.mxu0 0.0
    %915 = vmatpush1.msra.mxu0 0.0
    %916 = vmatprep.subr.mxu0 0.0
    %917 = vmatpush1.msra.mxu0 0.0
    %918 = vmatprep.subr.mxu0 0.0
    %919 = vmatpush1.msra.mxu0 0.0
    %920 = vmatprep.subr.mxu0 0.0
    %921 = vmatpush1.msra.mxu0 0.0
    %922 = vmatprep.subr.mxu0 0.0
    %923 = vmatpush1.msra.mxu0 0.0
    %924 = vmatprep.subr.mxu0 0.0
    %925 = vmatpush1.msra.mxu0 0.0
    %926 = vmatprep.subr.mxu0 0.0
    %927 = vmatpush1.msra.mxu0 0.0
    %928 = vmatprep.subr.mxu0 0.0
    %929 = vmatpush1.msra.mxu0 0.0
    %930 = vmatprep.subr.mxu0 0.0
    %931 = vmatpush1.msra.mxu0 0.0
    %932 = vmatprep.subr.mxu0 0.0
    %933 = vmatpush1.msra.mxu0 0.0
    %934 = vmatprep.subr.mxu0 0.0
    %935 = vmatpush1.msra.mxu0 0.0
    %936 = vmatprep.subr.mxu0 0.0
    %937 = vmatpush1.msra.mxu0 0.0
    %938 = vmatprep.subr.mxu0 0.0
    %939 = vmatpush1.msra.mxu0 0.0
    %940 = vmatprep.subr.mxu0 0.0
    %941 = vmatpush1.msra.mxu0 0.0
    %942 = vmatprep.subr.mxu0 0.0
    %943 = vmatpush1.msra.mxu0 0.0
    %944 = vmatprep.mubr.f32.mxu0 0.0
    %945 = vmatmul.mubr.f32.gmra.mrb[0].mxu0 %v824
    %v946 = vpop.f32.mrb[0].mxu0
    %v947 = vadd.f32 %v843, %v946
    %v948 = vpop.f32.mrb[0].mxu0
    %949 = vmatprep.mubr.f32.mxu0 0.0
    %950 = vmatmul.mubr.f32.gmra.mrb[0].mxu0 %v825
    %v951 = vpop.f32.mrb[0].mxu0
    %v952 = vadd.f32 %v848, %v951
    %v953 = vpop.f32.mrb[0].mxu0
    %954 = vmatprep.mubr.f32.mxu0 0.0
    %955 = vmatmul.mubr.f32.gmra.mrb[0].mxu0 %v826
    %v956 = vpop.f32.mrb[0].mxu0
    %v957 = vadd.f32 %v853, %v956
    %v958 = vpop.f32.mrb[0].mxu0
    %959 = vmatprep.mubr.f32.mxu0 0.0
    %960 = vmatmul.mubr.f32.gmra.mrb[0].mxu0 %v827
    %v961 = vpop.f32.mrb[0].mxu0
    %v962 = vadd.f32 %v858, %v961
    %v963 = vpop.f32.mrb[0].mxu0
    %964 = vmatprep.mubr.f32.mxu0 0.0
    %965 = vmatmul.mubr.f32.gmra.mrb[0].mxu0 %v828
    %v966 = vpop.f32.mrb[0].mxu0
    %v967 = vadd.f32 %v863, %v966
    %v968 = vpop.f32.mrb[0].mxu0
    %969 = vmatprep.mubr.f32.mxu0 0.0
    %970 = vmatmul.mubr.f32.gmra.mrb[0].mxu0 %v829
    %v971 = vpop.f32.mrb[0].mxu0
    %v972 = vadd.f32 %v868, %v971
    %v973 = vpop.f32.mrb[0].mxu0
    %974 = vmatprep.mubr.f32.mxu0 0.0
    %975 = vmatmul.mubr.f32.gmra.mrb[0].mxu0 %v830
    %v976 = vpop.f32.mrb[0].mxu0
    %v977 = vadd.f32 %v873, %v976
    %v978 = vpop.f32.mrb[0].mxu0
    %979 = vmatprep.mubr.f32.mxu0 0.0
    %980 = vmatmul.mubr.f32.gmra.mrb[0].mxu0 %v831
    %v981 = vpop.f32.mrb[0].mxu0
    %v982 = vadd.f32 %v878, %v981
    %v983 = vpop.f32.mrb[0].mxu0
    %984 = vdwg.mxu0
    %s985 = smul.f32 %s68, 0.5
    %v986 = vstv %s985
    %v987 = vmul.f32 %v986, %v947
    %v988 = vmul.f32 %v986, %v952
    %v989 = vmul.f32 %v986, %v957
    %v990 = vmul.f32 %v986, %v962
    %v991 = vmul.f32 %v986, %v967
    %v992 = vmul.f32 %v986, %v972
    %v993 = vmul.f32 %v986, %v977
    %v994 = vmul.f32 %v986, %v982
    %v995 = vtanh.pop %v987
    %v996 = vtanh.pop %v988
    %v997 = vtanh.pop %v989
    %v998 = vtanh.pop %v990
    %v999 = vtanh.pop %v991
    %v1000 = vtanh.pop %v992
    %v1001 = vtanh.pop %v993
    %v1002 = vtanh.pop %v994
    %v1003 = vadd.f32 %v995, 1.0
    %v1004 = vadd.f32 %v996, 1.0
    %v1005 = vadd.f32 %v997, 1.0
    %v1006 = vadd.f32 %v998, 1.0
    %v1007 = vadd.f32 %v999, 1.0
    %v1008 = vadd.f32 %v1000, 1.0
    %v1009 = vadd.f32 %v1001, 1.0
    %v1010 = vadd.f32 %v1002, 1.0
    %v1011 = vmul.f32 %v1003, 0.5
    %v1012 = vmul.f32 %v1004, 0.5
    %v1013 = vmul.f32 %v1005, 0.5
    %v1014 = vmul.f32 %v1006, 0.5
    %v1015 = vmul.f32 %v1007, 0.5
    %v1016 = vmul.f32 %v1008, 0.5
    %v1017 = vmul.f32 %v1009, 0.5
    %v1018 = vmul.f32 %v1010, 0.5
    %v1019 = vmul.f32 %v947, %v1011
    %v1020 = vmul.f32 %v952, %v1012
    %v1021 = vmul.f32 %v957, %v1013
    %v1022 = vmul.f32 %v962, %v1014
    %v1023 = vmul.f32 %v967, %v1015
    %v1024 = vmul.f32 %v972, %v1016
    %v1025 = vmul.f32 %v977, %v1017
    %v1026 = vmul.f32 %v982, %v1018
    %v1027 = vld [vmem:[%s16] sm:$0xff]
    %v1028 = vld [vmem:[%s17] sm:$0xff]
    %1030 = vset.pattern.permute.xlu0 0
    %1031 = vperm.xlu0 %1030, %v1028
    %v1032 = vpop.permute.xlu0 %1031
    %v1035 = vsel %vm288, %v1027, 0
    %1037 = vmatprep.subr.mxu0 0.0
    %1038 = vmatpush1.msra.mxu0 %v1019
    %1039 = vmatprep.subr.mxu0 0.0
    %1040 = vmatpush1.msra.mxu0 %v1020
    %1041 = vmatprep.subr.mxu0 0.0
    %1042 = vmatpush1.msra.mxu0 %v1021
    %1043 = vmatprep.subr.mxu0 0.0
    %1044 = vmatpush1.msra.mxu0 %v1022
    %1045 = vmatprep.subr.mxu0 0.0
    %1046 = vmatpush1.msra.mxu0 %v1023
    %1047 = vmatprep.subr.mxu0 0.0
    %1048 = vmatpush1.msra.mxu0 %v1024
    %1049 = vmatprep.subr.mxu0 0.0
    %1050 = vmatpush1.msra.mxu0 %v1025
    %1051 = vmatprep.subr.mxu0 0.0
    %1052 = vmatpush1.msra.mxu0 %v1026
    %1053 = vmatprep.subr.mxu0 0.0
    %1054 = vmatpush1.msra.mxu0 0.0
    %1055 = vmatprep.subr.mxu0 0.0
    %1056 = vmatpush1.msra.mxu0 0.0
    %1057 = vmatprep.subr.mxu0 0.0
    %1058 = vmatpush1.msra.mxu0 0.0
    %1059 = vmatprep.subr.mxu0 0.0
    %1060 = vmatpush1.msra.mxu0 0.0
    %1061 = vmatprep.subr.mxu0 0.0
    %1062 = vmatpush1.msra.mxu0 0.0
    %1063 = vmatprep.subr.mxu0 0.0
    %1064 = vmatpush1.msra.mxu0 0.0
    %1065 = vmatprep.subr.mxu0 0.0
    %1066 = vmatpush1.msra.mxu0 0.0
    %1067 = vmatprep.subr.mxu0 0.0
    %1068 = vmatpush1.msra.mxu0 0.0
    %1069 = vmatprep.subr.mxu0 0.0
    %1070 = vmatpush1.msra.mxu0 0.0
    %1071 = vmatprep.subr.mxu0 0.0
    %1072 = vmatpush1.msra.mxu0 0.0
    %1073 = vmatprep.subr.mxu0 0.0
    %1074 = vmatpush1.msra.mxu0 0.0
    %1075 = vmatprep.subr.mxu0 0.0
    %1076 = vmatpush1.msra.mxu0 0.0
    %1077 = vmatprep.subr.mxu0 0.0
    %1078 = vmatpush1.msra.mxu0 0.0
    %1079 = vmatprep.subr.mxu0 0.0
    %1080 = vmatpush1.msra.mxu0 0.0
    %1081 = vmatprep.subr.mxu0 0.0
    %1082 = vmatpush1.msra.mxu0 0.0
    %1083 = vmatprep.subr.mxu0 0.0
    %1084 = vmatpush1.msra.mxu0 0.0
    %1085 = vmatprep.subr.mxu0 0.0
    %1086 = vmatpush1.msra.mxu0 0.0
    %1087 = vmatprep.subr.mxu0 0.0
    %1088 = vmatpush1.msra.mxu0 0.0
    %1089 = vmatprep.subr.mxu0 0.0
    %1090 = vmatpush1.msra.mxu0 0.0
    %1091 = vmatprep.subr.mxu0 0.0
    %1092 = vmatpush1.msra.mxu0 0.0
    %1093 = vmatprep.subr.mxu0 0.0
    %1094 = vmatpush1.msra.mxu0 0.0
    %1095 = vmatprep.subr.mxu0 0.0
    %1096 = vmatpush1.msra.mxu0 0.0
    %1097 = vmatprep.subr.mxu0 0.0
    %1098 = vmatpush1.msra.mxu0 0.0
    %1099 = vmatprep.subr.mxu0 0.0
    %1100 = vmatpush1.msra.mxu0 0.0
    %1101 = vmatprep.mubr.f32.mxu0 0.0
    %1102 = vmatmul.mubr.f32.gmra.mrb[0].mxu0 %v1035
    %v1103 = vpop.f32.mrb[0].mxu0
    %v1104 = vadd.f32 %v1032, %v1103
    %v1105 = vpop.f32.mrb[0].mxu0
    %1106 = vdwg.mxu0
    %s1107 = smul.f32 %s69, 0.5
    %v1108 = vstv %s1107
    %v1109 = vmul.f32 %v1108, %v1104
    %v1110 = vtanh.pop %v1109
    %v1111 = vadd.f32 %v1110, 1.0
    %v1112 = vmul.f32 %v1111, 0.5
    %v1113 = vmul.f32 %v1104, %v1112
    %1114 = vst [vmem:[#allocation4] sm:$0xff] %v1113
    // Predicated region
    $region70: #{tpu_custom_call.1} parent=1 // pred_check
      _
    $region71: #{tpu_custom_call.1} parent=1 // pred_check_branch
      %1116 = sbr.rel (0) target = $region73
    $region72: #{tpu_custom_call.1} parent=1 // pred_region
      %s1118 = ssub.s32 128, 128
      %1119 = vsyncadd [#allocation5], %s1118
      %s1121 = sshll.u32 [#allocation4], 4
      %s1122 = int_to_ptr.vmem [resolvable:$true] %s1121
      %1124 = dma.vmem_to_hbm [thread:$0]  %s1122, 128, %s18, [#allocation5]
    $region73: #{tpu_custom_call.1} parent=1 // pred_fallthru
      _
    // Predicated region
    $region74: #{tpu_custom_call.1} parent=1 // pred_check
      _
    $region75: #{tpu_custom_call.1} parent=1 // pred_check_branch
      %1126 = sbr.rel (0) target = $region77
    $region76: #{tpu_custom_call.1} parent=1 // pred_region
      %1127 = dma.done [#allocation5], 128
    $region77: #{tpu_custom_call.1} parent=1 // pred_fallthru
      _
    %1128 = vsyncpa [#allocation5], 1

</llo_original>
